<compile_context>
chip_gen: v7x
topology: tpu7x:2x2x1
jax: 0.10.0
libtpu: 0.0.40
codegen_flags: <defaults>
</compile_context>

<pallas_src>
import math

import jax
import jax.numpy as jnp
from jax.experimental import pallas as pl
from jax.experimental.pallas import tpu as pltpu


def attention_pooling_kernel(qh_ref, wkvT_ref, bkvT_ref, woH_ref, vecs_ref,
                             featT_ref, mask_ref, o_ref):
    H, C, D = qh_ref.shape          # heads, num_classes, head_dim
    E = H * D
    Bt, _, S = mask_ref.shape       # batch tile, 1, seq_len

    # --- fused K+V projection for the whole batch tile: ONE bf16 MXU call ---
    #   (2E, K) @ (K, Bt*S) -> (2E, Bt*S), f32 accumulation, bias broadcast over lanes.
    kvpT = jnp.dot(wkvT_ref[...], featT_ref[...],
                   preferred_element_type=jnp.float32) + bkvT_ref[...]

    qh = qh_ref[...].astype(jnp.float32)        # (H, C, D); scale already folded in
    woH = woH_ref[...]                          # (H, D, E) bf16
    bo = vecs_ref[0:1, :]
    gamma = vecs_ref[1:2, :]
    beta = vecs_ref[2:3, :]

    dense_rows = []
    for b in range(Bt):                         # Bt is a small compile-time constant
        # Head split is a sublane-aligned reshape of the transposed projection
        # (groups of 8 rows == whole vregs): no lane shuffles, no per-head lane slices.
        kv_b = kvpT[:, b * S:(b + 1) * S].reshape(2, H, D, S)
        kT = kv_b[0]                            # (H, D, S)
        vT = kv_b[1]                            # (H, D, S)

        # Batched-head attention, canonical batched-matmul forms.
        s = jnp.einsum('hcd,hds->hcs', qh, kT,
                       preferred_element_type=jnp.float32)          # (H, C, S)
        s = s + mask_ref[b]                     # (1, S) additive mask broadcasts
        m = jnp.max(s, axis=-1, keepdims=True)
        p = jnp.exp(s - m)
        l = jnp.sum(p, axis=-1, keepdims=True)
        probs = p * pl.reciprocal(l, approx=True)                    # EUP, not VALU divide
        attn = jnp.einsum('hcs,hds->hcd', probs, vT,
                          preferred_element_type=jnp.float32)        # (H, C, D)

        # Output projection with Wo pre-split per head: contract D per head, sum heads.
        out_b = jnp.einsum('hcd,hde->hce', attn.astype(woH.dtype), woH,
                           preferred_element_type=jnp.float32).sum(axis=0) + bo   # (C, E)

        # LayerNorm(E), eps = 1e-5
        mu = jnp.mean(out_b, axis=-1, keepdims=True)
        var = jnp.mean(jnp.square(out_b - mu), axis=-1, keepdims=True)
        out_b = (out_b - mu) * jax.lax.rsqrt(var + 1e-5) * gamma + beta

        # Pack the (C, E) result into one lane-dense (1, C*E) row -> unmasked 256-lane store.
        dense_rows.append(
            jnp.concatenate([out_b[c:c + 1, :] for c in range(C)], axis=1))

    o_ref[...] = jnp.concatenate(dense_rows, axis=0)                 # (Bt, C*E)


def attention_pooling(feature_sbk, key_padding_mask, params, num_heads):
    """feature_sbk: (S, B, kdim) f32; key_padding_mask: (B, S) bool (True = masked)."""
    S, B, K = feature_sbk.shape
    C, E = params["q"].shape
    H = num_heads
    D = E // H
    scale = 1.0 / math.sqrt(D)
    f32, bf16 = jnp.float32, jnp.bfloat16

    # ---- one-time parameter prep (hoisted out of the kernel; all tiny) ----
    # Query projection is batch invariant: compute it once, fold the 1/sqrt(D) scale in,
    # and lay it out head-major (H, C, D).
    qp = params["q"] @ (params["wq"] * scale) + params["bq"] * scale           # (C, E)
    qh = jnp.transpose(qp.reshape(C, H, D), (1, 0, 2)).astype(bf16)            # (H, C, D)

    # Fused, transposed K/V projection weights: (2E, K); bias as a column (2E, 1).
    wkvT = jnp.concatenate([params["wk"], params["wv"]], axis=1).T.astype(bf16)
    bkvT = jnp.concatenate([params["bk"], params["bv"]], axis=1).reshape(2 * E, 1).astype(f32)

    # Output projection pre-split per head: (H, D, E).
    woH = params["wo"].reshape(H, D, E).astype(bf16)

    # Pack the remaining (1, E) vectors into one slab: [bo; ln_gamma; ln_beta].
    vecs = jnp.concatenate([params["bo"], params["ln_g"], params["ln_b"]], axis=0).astype(f32)

    # Feature transposed & flattened so batch/seq live in lanes: (K, B*S), bf16 halves DMA.
    featT = jnp.transpose(feature_sbk, (2, 1, 0)).reshape(K, B * S).astype(bf16)

    # Additive key-padding mask, large finite negative (safer than -inf): (B, 1, S).
    mask3 = jnp.where(key_padding_mask, -1e30, 0.0).astype(f32)[:, None, :]

    # Batch tile: at these sizes one grid step handles the whole batch (overhead-bound regime).
    # For large B, pick Bt so that Bt*S is a multiple of 128 (lane-aligned feature tiles).
    Bt = B
    n_tiles = pl.cdiv(B, Bt)

    dense = pl.pallas_call(
        attention_pooling_kernel,
        out_shape=jax.ShapeDtypeStruct((B, C * E), f32),
        grid_spec=pltpu.PrefetchScalarGridSpec(
            num_scalar_prefetch=0,
            grid=(n_tiles,),
            in_specs=[
                pl.BlockSpec((H, C, D), lambda i: (0, 0, 0)),      # qh (pre-projected, pre-scaled)
                pl.BlockSpec((2 * E, K), lambda i: (0, 0)),        # fused K/V weights (transposed)
                pl.BlockSpec((2 * E, 1), lambda i: (0, 0)),        # fused K/V bias
                pl.BlockSpec((H, D, E), lambda i: (0, 0, 0)),      # Wo split per head
                pl.BlockSpec((3, E), lambda i: (0, 0)),            # [bo; gamma; beta]
                pl.BlockSpec((K, Bt * S), lambda i: (0, i)),       # feature tile (transposed)
                pl.BlockSpec((Bt, 1, S), lambda i: (i, 0, 0)),     # additive mask
            ],
            out_specs=pl.BlockSpec((Bt, C * E), lambda i: (i, 0)), # lane-dense (256-lane) rows
        ),
        compiler_params=pltpu.CompilerParams(
            dimension_semantics=("arbitrary",)),
    )(qh, wkvT, bkvT, woH, vecs, featT, mask3)

    # back to PyTorch output layout: (num_classes, batch, embed_dim)
    return jnp.transpose(dense.reshape(B, C, E), (1, 0, 2))


def init_params(key, embed_dim, kdim, num_classes):
    ks = jax.random.split(key, 8)
    s_e = 1.0 / math.sqrt(embed_dim)
    s_k = 1.0 / math.sqrt(kdim)
    return {
        # weights stored as (in_features, out_features): y = x @ W + b
        "q":    jax.random.uniform(ks[0], (num_classes, embed_dim), jnp.float32),
        "wq":   jax.random.uniform(ks[1], (embed_dim, embed_dim), jnp.float32, -s_e, s_e),
        "bq":   jnp.zeros((1, embed_dim), jnp.float32),
        "wk":   jax.random.uniform(ks[2], (kdim, embed_dim), jnp.float32, -s_k, s_k),
        "bk":   jnp.zeros((1, embed_dim), jnp.float32),
        "wv":   jax.random.uniform(ks[3], (kdim, embed_dim), jnp.float32, -s_k, s_k),
        "bv":   jnp.zeros((1, embed_dim), jnp.float32),
        "wo":   jax.random.uniform(ks[4], (embed_dim, embed_dim), jnp.float32, -s_e, s_e),
        "bo":   jnp.zeros((1, embed_dim), jnp.float32),
        "ln_g": jnp.ones((1, embed_dim), jnp.float32),
        "ln_b": jnp.zeros((1, embed_dim), jnp.float32),
    }


def _reference(feature_sbk, mask, params, num_heads):
    """Pure-JAX f32 reference of the PyTorch module (eval mode)."""
    S, B, K = feature_sbk.shape
    C, E = params["q"].shape
    H, D = num_heads, E // num_heads
    scale = 1.0 / math.sqrt(D)
    feat = jnp.transpose(feature_sbk, (1, 0, 2))                       # (B, S, K)
    qp = (params["q"] @ params["wq"] + params["bq"]) * scale           # (C, E)
    kp = feat @ params["wk"] + params["bk"]                            # (B, S, E)
    vp = feat @ params["wv"] + params["bv"]
    qh = qp.reshape(C, H, D)
    kh = kp.reshape(B, S, H, D)
    vh = vp.reshape(B, S, H, D)
    s = jnp.einsum('chd,bshd->bhcs', qh, kh)
    s = s + jnp.where(mask, -1e30, 0.0)[:, None, None, :]
    p = jax.nn.softmax(s, axis=-1)
    attn = jnp.einsum('bhcs,bshd->bchd', p, vh).reshape(B, C, E)
    out = attn @ params["wo"] + params["bo"]
    mu = out.mean(-1, keepdims=True)
    var = ((out - mu) ** 2).mean(-1, keepdims=True)
    out = (out - mu) / jnp.sqrt(var + 1e-5) * params["ln_g"] + params["ln_b"]
    return jnp.transpose(out, (1, 0, 2))                               # (C, B, E)


if __name__ == "__main__":
    # Small shapes consistent with the module's forward:
    #   embed_dim=32, num_heads=4, kdim=48, num_classes=8, seq=16, batch=2
    embed_dim, num_heads, kdim, num_classes = 32, 4, 48, 8
    S, B = 16, 2

    key = jax.random.PRNGKey(0)
    k_param, k_feat = jax.random.split(key)
    params = init_params(k_param, embed_dim, kdim, num_classes)

    feature = jax.random.normal(k_feat, (S, B, kdim), jnp.float32)     # (seq, batch, kdim)
    lengths = jnp.array([S, S - 4])
    key_padding_mask = jnp.arange(S)[None, :] >= lengths[:, None]      # (B, S), True = pad

    out = attention_pooling(feature, key_padding_mask, params, num_heads)
    jax.block_until_ready(out)
    assert out.shape == (num_classes, B, embed_dim)

    # loose tolerance: inputs/weights are cast to bf16 on the way into the kernel
    ref = _reference(feature, key_padding_mask, params, num_heads)
    max_err = float(jnp.max(jnp.abs(out - ref)))
    assert max_err < 0.1, f"max abs error vs reference: {max_err}"
    print("KERNEL_OK")
</pallas_src>

<mosaic_0001>
module attributes {stable_mosaic.version = 11 : i64} {
  func.func @attention_pooling_kernel(%arg0: i32, %arg1: memref<4x8x8xbf16, #tpu.memory_space<vmem>>, %arg2: memref<64x48xbf16, #tpu.memory_space<vmem>>, %arg3: memref<64x1xf32, #tpu.memory_space<vmem>>, %arg4: memref<4x8x32xbf16, #tpu.memory_space<vmem>>, %arg5: memref<3x32xf32, #tpu.memory_space<vmem>>, %arg6: memref<48x32xbf16, #tpu.memory_space<vmem>>, %arg7: memref<2x1x16xf32, #tpu.memory_space<vmem>>, %arg8: memref<2x256xf32, #tpu.memory_space<vmem>>) attributes {dimension_semantics = [#tpu.dimension_semantics<arbitrary>], iteration_bounds = array<i64: 1>, scalar_prefetch = 0 : i64, scratch_operands = 0 : i64, tpu.core_type = #tpu.core_type<tc>, window_params = [{pipeline_mode = #tpu.pipeline_mode<synchronous>, transform_indices = @transform_0, window_bounds = array<i64: 4, 8, 8>}, {pipeline_mode = #tpu.pipeline_mode<synchronous>, transform_indices = @transform_1, window_bounds = array<i64: 64, 48>}, {pipeline_mode = #tpu.pipeline_mode<synchronous>, transform_indices = @transform_2, window_bounds = array<i64: 64, 1>}, {pipeline_mode = #tpu.pipeline_mode<synchronous>, transform_indices = @transform_3, window_bounds = array<i64: 4, 8, 32>}, {pipeline_mode = #tpu.pipeline_mode<synchronous>, transform_indices = @transform_4, window_bounds = array<i64: 3, 32>}, {transform_indices = @transform_5, window_bounds = array<i64: 48, 32>}, {transform_indices = @transform_6, window_bounds = array<i64: 2, 1, 16>}, {transform_indices = @transform_7, window_bounds = array<i64: 2, 256>}]} {
    %c0 = arith.constant 0 : index
    %c0_0 = arith.constant 0 : index
    %0 = vector.load %arg2[%c0, %c0_0] : memref<64x48xbf16, #tpu.memory_space<vmem>>, vector<64x48xbf16>
    %c0_1 = arith.constant 0 : index
    %c0_2 = arith.constant 0 : index
    %1 = vector.load %arg6[%c0_1, %c0_2] : memref<48x32xbf16, #tpu.memory_space<vmem>>, vector<48x32xbf16>
    %cst = arith.constant dense<0.000000e+00> : vector<64x32xf32>
    %2 = tpu.matmul %0, %1, %cst {dimension_numbers = #tpu.dot_dimension_numbers<[1], [0], [0], [1], [0, 0, 1, 1], [], []>} : vector<64x48xbf16>, vector<48x32xbf16>, vector<64x32xf32> -> vector<64x32xf32>
    %c0_3 = arith.constant 0 : index
    %c0_4 = arith.constant 0 : index
    %3 = vector.load %arg3[%c0_3, %c0_4] : memref<64x1xf32, #tpu.memory_space<vmem>>, vector<64x1xf32>
    %4 = vector.broadcast %3 : vector<64x1xf32> to vector<64x32xf32>
    %5 = arith.addf %2, %4 : vector<64x32xf32>
    %c0_5 = arith.constant 0 : index
    %c0_6 = arith.constant 0 : index
    %c0_7 = arith.constant 0 : index
    %6 = vector.load %arg1[%c0_5, %c0_6, %c0_7] : memref<4x8x8xbf16, #tpu.memory_space<vmem>>, vector<4x8x8xbf16>
    %7 = arith.extf %6 : vector<4x8x8xbf16> to vector<4x8x8xf32>
    %c0_8 = arith.constant 0 : index
    %c0_9 = arith.constant 0 : index
    %c0_10 = arith.constant 0 : index
    %8 = vector.load %arg4[%c0_8, %c0_9, %c0_10] : memref<4x8x32xbf16, #tpu.memory_space<vmem>>, vector<4x8x32xbf16>
    %c0_11 = arith.constant 0 : index
    %c0_12 = arith.constant 0 : index
    %9 = vector.load %arg5[%c0_11, %c0_12] : memref<3x32xf32, #tpu.memory_space<vmem>>, vector<1x32xf32>
    %c1 = arith.constant 1 : index
    %c0_13 = arith.constant 0 : index
    %10 = vector.load %arg5[%c1, %c0_13] : memref<3x32xf32, #tpu.memory_space<vmem>>, vector<1x32xf32>
    %c2 = arith.constant 2 : index
    %c0_14 = arith.constant 0 : index
    %11 = vector.load %arg5[%c2, %c0_14] : memref<3x32xf32, #tpu.memory_space<vmem>>, vector<1x32xf32>
    %12 = vector.extract_strided_slice %5 {offsets = [0, 0], sizes = [64, 16], strides = [1, 1]} : vector<64x32xf32> to vector<64x16xf32>
    %13 = vector.shape_cast %12 : vector<64x16xf32> to vector<2x4x8x16xf32>
    %14 = vector.extract_strided_slice %13 {offsets = [0, 0, 0, 0], sizes = [1, 4, 8, 16], strides = [1, 1, 1, 1]} : vector<2x4x8x16xf32> to vector<1x4x8x16xf32>
    %15 = vector.shape_cast %14 : vector<1x4x8x16xf32> to vector<4x8x16xf32>
    %16 = vector.extract_strided_slice %13 {offsets = [1, 0, 0, 0], sizes = [1, 4, 8, 16], strides = [1, 1, 1, 1]} : vector<2x4x8x16xf32> to vector<1x4x8x16xf32>
    %17 = vector.shape_cast %16 : vector<1x4x8x16xf32> to vector<4x8x16xf32>
    "tpu.trace_start"() <{level = 10 : i32, message = "hcd,hds->hcs"}> : () -> ()
    %cst_15 = arith.constant dense<0.000000e+00> : vector<4x8x16xf32>
    %18 = tpu.matmul %7, %15, %cst_15 {dimension_numbers = #tpu.dot_dimension_numbers<[2], [1], [1], [2], [0, 0, 0, 1, 1, 2], [0], [0]>} : vector<4x8x8xf32>, vector<4x8x16xf32>, vector<4x8x16xf32> -> vector<4x8x16xf32>
    "tpu.trace_stop"() : () -> ()
    %c0_16 = arith.constant 0 : index
    %c0_17 = arith.constant 0 : index
    %c0_18 = arith.constant 0 : index
    %19 = vector.load %arg7[%c0_16, %c0_17, %c0_18] : memref<2x1x16xf32, #tpu.memory_space<vmem>>, vector<1x1x16xf32>
    %20 = vector.shape_cast %19 : vector<1x1x16xf32> to vector<1x16xf32>
    %21 = vector.shape_cast %20 : vector<1x16xf32> to vector<1x1x16xf32>
    %22 = vector.broadcast %21 : vector<1x1x16xf32> to vector<4x8x16xf32>
    %23 = arith.addf %18, %22 : vector<4x8x16xf32>
    %cst_19 = arith.constant dense<0xFF800000> : vector<4x8xf32>
    %24 = vector.multi_reduction <maximumf>, %23, %cst_19 [2] : vector<4x8x16xf32> to vector<4x8xf32>
    %25 = vector.shape_cast %24 : vector<4x8xf32> to vector<4x8x1xf32>
    %26 = vector.broadcast %25 : vector<4x8x1xf32> to vector<4x8x16xf32>
    %27 = arith.subf %23, %26 : vector<4x8x16xf32>
    %28 = math.exp %27 : vector<4x8x16xf32>
    %cst_20 = arith.constant dense<0.000000e+00> : vector<4x8xf32>
    %29 = vector.multi_reduction <add>, %28, %cst_20 [2] : vector<4x8x16xf32> to vector<4x8xf32>
    %30 = vector.shape_cast %29 : vector<4x8xf32> to vector<4x8x1xf32>
    %31 = tpu.reciprocal %30 {approx = true} : vector<4x8x1xf32> -> vector<4x8x1xf32>
    %32 = vector.broadcast %31 : vector<4x8x1xf32> to vector<4x8x16xf32>
    %33 = arith.mulf %28, %32 : vector<4x8x16xf32>
    "tpu.trace_start"() <{level = 10 : i32, message = "hcs,hds->hcd"}> : () -> ()
    %cst_21 = arith.constant dense<0.000000e+00> : vector<4x8x8xf32>
    %34 = tpu.matmul %33, %17, %cst_21 {dimension_numbers = #tpu.dot_dimension_numbers<[2], [2], [1], [1], [0, 0, 0, 1, 1, 1], [0], [0]>} : vector<4x8x16xf32>, vector<4x8x16xf32>, vector<4x8x8xf32> -> vector<4x8x8xf32>
    "tpu.trace_stop"() : () -> ()
    %35 = arith.truncf %34 : vector<4x8x8xf32> to vector<4x8x8xbf16>
    "tpu.trace_start"() <{level = 10 : i32, message = "hcd,hde->hce"}> : () -> ()
    %cst_22 = arith.constant dense<0.000000e+00> : vector<4x8x32xf32>
    %36 = tpu.matmul %35, %8, %cst_22 {dimension_numbers = #tpu.dot_dimension_numbers<[2], [1], [1], [2], [0, 0, 0, 1, 1, 2], [0], [0]>} : vector<4x8x8xbf16>, vector<4x8x32xbf16>, vector<4x8x32xf32> -> vector<4x8x32xf32>
    "tpu.trace_stop"() : () -> ()
    %cst_23 = arith.constant dense<0.000000e+00> : vector<8x32xf32>
    %37 = vector.multi_reduction <add>, %36, %cst_23 [0] : vector<4x8x32xf32> to vector<8x32xf32>
    %38 = vector.broadcast %9 : vector<1x32xf32> to vector<8x32xf32>
    %39 = arith.addf %37, %38 : vector<8x32xf32>
    %cst_24 = arith.constant dense<0.000000e+00> : vector<8xf32>
    %40 = vector.multi_reduction <add>, %39, %cst_24 [1] : vector<8x32xf32> to vector<8xf32>
    %41 = vector.shape_cast %40 : vector<8xf32> to vector<8x1xf32>
    %cst_25 = arith.constant 3.200000e+01 : f32
    %42 = vector.broadcast %cst_25 : f32 to vector<8x1xf32>
    %43 = arith.divf %41, %42 : vector<8x1xf32>
    %44 = vector.broadcast %43 : vector<8x1xf32> to vector<8x32xf32>
    %45 = arith.subf %39, %44 : vector<8x32xf32>
    %46 = arith.mulf %45, %45 : vector<8x32xf32>
    %cst_26 = arith.constant dense<0.000000e+00> : vector<8xf32>
    %47 = vector.multi_reduction <add>, %46, %cst_26 [1] : vector<8x32xf32> to vector<8xf32>
    %48 = vector.shape_cast %47 : vector<8xf32> to vector<8x1xf32>
    %cst_27 = arith.constant 3.200000e+01 : f32
    %49 = vector.broadcast %cst_27 : f32 to vector<8x1xf32>
    %50 = arith.divf %48, %49 : vector<8x1xf32>
    %51 = vector.broadcast %43 : vector<8x1xf32> to vector<8x32xf32>
    %52 = arith.subf %39, %51 : vector<8x32xf32>
    %cst_28 = arith.constant 9.99999974E-6 : f32
    %53 = vector.broadcast %cst_28 : f32 to vector<8x1xf32>
    %54 = arith.addf %50, %53 : vector<8x1xf32>
    %55 = math.rsqrt %54 : vector<8x1xf32>
    %56 = vector.broadcast %55 : vector<8x1xf32> to vector<8x32xf32>
    %57 = arith.mulf %52, %56 : vector<8x32xf32>
    %58 = vector.broadcast %10 : vector<1x32xf32> to vector<8x32xf32>
    %59 = arith.mulf %57, %58 : vector<8x32xf32>
    %60 = vector.broadcast %11 : vector<1x32xf32> to vector<8x32xf32>
    %61 = arith.addf %59, %60 : vector<8x32xf32>
    %62 = vector.extract_strided_slice %61 {offsets = [0, 0], sizes = [1, 32], strides = [1, 1]} : vector<8x32xf32> to vector<1x32xf32>
    %63 = vector.extract_strided_slice %61 {offsets = [1, 0], sizes = [1, 32], strides = [1, 1]} : vector<8x32xf32> to vector<1x32xf32>
    %64 = vector.extract_strided_slice %61 {offsets = [2, 0], sizes = [1, 32], strides = [1, 1]} : vector<8x32xf32> to vector<1x32xf32>
    %65 = vector.extract_strided_slice %61 {offsets = [3, 0], sizes = [1, 32], strides = [1, 1]} : vector<8x32xf32> to vector<1x32xf32>
    %66 = vector.extract_strided_slice %61 {offsets = [4, 0], sizes = [1, 32], strides = [1, 1]} : vector<8x32xf32> to vector<1x32xf32>
    %67 = vector.extract_strided_slice %61 {offsets = [5, 0], sizes = [1, 32], strides = [1, 1]} : vector<8x32xf32> to vector<1x32xf32>
    %68 = vector.extract_strided_slice %61 {offsets = [6, 0], sizes = [1, 32], strides = [1, 1]} : vector<8x32xf32> to vector<1x32xf32>
    %69 = vector.extract_strided_slice %61 {offsets = [7, 0], sizes = [1, 32], strides = [1, 1]} : vector<8x32xf32> to vector<1x32xf32>
    %70 = tpu.concatenate %62, %63, %64, %65, %66, %67, %68, %69 in 1 : vector<1x32xf32>, vector<1x32xf32>, vector<1x32xf32>, vector<1x32xf32>, vector<1x32xf32>, vector<1x32xf32>, vector<1x32xf32>, vector<1x32xf32> -> vector<1x256xf32>
    %71 = vector.extract_strided_slice %5 {offsets = [0, 16], sizes = [64, 16], strides = [1, 1]} : vector<64x32xf32> to vector<64x16xf32>
    %72 = vector.shape_cast %71 : vector<64x16xf32> to vector<2x4x8x16xf32>
    %73 = vector.extract_strided_slice %72 {offsets = [0, 0, 0, 0], sizes = [1, 4, 8, 16], strides = [1, 1, 1, 1]} : vector<2x4x8x16xf32> to vector<1x4x8x16xf32>
    %74 = vector.shape_cast %73 : vector<1x4x8x16xf32> to vector<4x8x16xf32>
    %75 = vector.extract_strided_slice %72 {offsets = [1, 0, 0, 0], sizes = [1, 4, 8, 16], strides = [1, 1, 1, 1]} : vector<2x4x8x16xf32> to vector<1x4x8x16xf32>
    %76 = vector.shape_cast %75 : vector<1x4x8x16xf32> to vector<4x8x16xf32>
    "tpu.trace_start"() <{level = 10 : i32, message = "hcd,hds->hcs"}> : () -> ()
    %cst_29 = arith.constant dense<0.000000e+00> : vector<4x8x16xf32>
    %77 = tpu.matmul %7, %74, %cst_29 {dimension_numbers = #tpu.dot_dimension_numbers<[2], [1], [1], [2], [0, 0, 0, 1, 1, 2], [0], [0]>} : vector<4x8x8xf32>, vector<4x8x16xf32>, vector<4x8x16xf32> -> vector<4x8x16xf32>
    "tpu.trace_stop"() : () -> ()
    %c1_30 = arith.constant 1 : index
    %c0_31 = arith.constant 0 : index
    %c0_32 = arith.constant 0 : index
    %78 = vector.load %arg7[%c1_30, %c0_31, %c0_32] : memref<2x1x16xf32, #tpu.memory_space<vmem>>, vector<1x1x16xf32>
    %79 = vector.shape_cast %78 : vector<1x1x16xf32> to vector<1x16xf32>
    %80 = vector.shape_cast %79 : vector<1x16xf32> to vector<1x1x16xf32>
    %81 = vector.broadcast %80 : vector<1x1x16xf32> to vector<4x8x16xf32>
    %82 = arith.addf %77, %81 : vector<4x8x16xf32>
    %cst_33 = arith.constant dense<0xFF800000> : vector<4x8xf32>
    %83 = vector.multi_reduction <maximumf>, %82, %cst_33 [2] : vector<4x8x16xf32> to vector<4x8xf32>
    %84 = vector.shape_cast %83 : vector<4x8xf32> to vector<4x8x1xf32>
    %85 = vector.broadcast %84 : vector<4x8x1xf32> to vector<4x8x16xf32>
    %86 = arith.subf %82, %85 : vector<4x8x16xf32>
    %87 = math.exp %86 : vector<4x8x16xf32>
    %cst_34 = arith.constant dense<0.000000e+00> : vector<4x8xf32>
    %88 = vector.multi_reduction <add>, %87, %cst_34 [2] : vector<4x8x16xf32> to vector<4x8xf32>
    %89 = vector.shape_cast %88 : vector<4x8xf32> to vector<4x8x1xf32>
    %90 = tpu.reciprocal %89 {approx = true} : vector<4x8x1xf32> -> vector<4x8x1xf32>
    %91 = vector.broadcast %90 : vector<4x8x1xf32> to vector<4x8x16xf32>
    %92 = arith.mulf %87, %91 : vector<4x8x16xf32>
    "tpu.trace_start"() <{level = 10 : i32, message = "hcs,hds->hcd"}> : () -> ()
    %cst_35 = arith.constant dense<0.000000e+00> : vector<4x8x8xf32>
    %93 = tpu.matmul %92, %76, %cst_35 {dimension_numbers = #tpu.dot_dimension_numbers<[2], [2], [1], [1], [0, 0, 0, 1, 1, 1], [0], [0]>} : vector<4x8x16xf32>, vector<4x8x16xf32>, vector<4x8x8xf32> -> vector<4x8x8xf32>
    "tpu.trace_stop"() : () -> ()
    %94 = arith.truncf %93 : vector<4x8x8xf32> to vector<4x8x8xbf16>
    "tpu.trace_start"() <{level = 10 : i32, message = "hcd,hde->hce"}> : () -> ()
    %cst_36 = arith.constant dense<0.000000e+00> : vector<4x8x32xf32>
    %95 = tpu.matmul %94, %8, %cst_36 {dimension_numbers = #tpu.dot_dimension_numbers<[2], [1], [1], [2], [0, 0, 0, 1, 1, 2], [0], [0]>} : vector<4x8x8xbf16>, vector<4x8x32xbf16>, vector<4x8x32xf32> -> vector<4x8x32xf32>
    "tpu.trace_stop"() : () -> ()
    %cst_37 = arith.constant dense<0.000000e+00> : vector<8x32xf32>
    %96 = vector.multi_reduction <add>, %95, %cst_37 [0] : vector<4x8x32xf32> to vector<8x32xf32>
    %97 = vector.broadcast %9 : vector<1x32xf32> to vector<8x32xf32>
    %98 = arith.addf %96, %97 : vector<8x32xf32>
    %cst_38 = arith.constant dense<0.000000e+00> : vector<8xf32>
    %99 = vector.multi_reduction <add>, %98, %cst_38 [1] : vector<8x32xf32> to vector<8xf32>
    %100 = vector.shape_cast %99 : vector<8xf32> to vector<8x1xf32>
    %cst_39 = arith.constant 3.200000e+01 : f32
    %101 = vector.broadcast %cst_39 : f32 to vector<8x1xf32>
    %102 = arith.divf %100, %101 : vector<8x1xf32>
    %103 = vector.broadcast %102 : vector<8x1xf32> to vector<8x32xf32>
    %104 = arith.subf %98, %103 : vector<8x32xf32>
    %105 = arith.mulf %104, %104 : vector<8x32xf32>
    %cst_40 = arith.constant dense<0.000000e+00> : vector<8xf32>
    %106 = vector.multi_reduction <add>, %105, %cst_40 [1] : vector<8x32xf32> to vector<8xf32>
    %107 = vector.shape_cast %106 : vector<8xf32> to vector<8x1xf32>
    %cst_41 = arith.constant 3.200000e+01 : f32
    %108 = vector.broadcast %cst_41 : f32 to vector<8x1xf32>
    %109 = arith.divf %107, %108 : vector<8x1xf32>
    %110 = vector.broadcast %102 : vector<8x1xf32> to vector<8x32xf32>
    %111 = arith.subf %98, %110 : vector<8x32xf32>
    %cst_42 = arith.constant 9.99999974E-6 : f32
    %112 = vector.broadcast %cst_42 : f32 to vector<8x1xf32>
    %113 = arith.addf %109, %112 : vector<8x1xf32>
    %114 = math.rsqrt %113 : vector<8x1xf32>
    %115 = vector.broadcast %114 : vector<8x1xf32> to vector<8x32xf32>
    %116 = arith.mulf %111, %115 : vector<8x32xf32>
    %117 = vector.broadcast %10 : vector<1x32xf32> to vector<8x32xf32>
    %118 = arith.mulf %116, %117 : vector<8x32xf32>
    %119 = vector.broadcast %11 : vector<1x32xf32> to vector<8x32xf32>
    %120 = arith.addf %118, %119 : vector<8x32xf32>
    %121 = vector.extract_strided_slice %120 {offsets = [0, 0], sizes = [1, 32], strides = [1, 1]} : vector<8x32xf32> to vector<1x32xf32>
    %122 = vector.extract_strided_slice %120 {offsets = [1, 0], sizes = [1, 32], strides = [1, 1]} : vector<8x32xf32> to vector<1x32xf32>
    %123 = vector.extract_strided_slice %120 {offsets = [2, 0], sizes = [1, 32], strides = [1, 1]} : vector<8x32xf32> to vector<1x32xf32>
    %124 = vector.extract_strided_slice %120 {offsets = [3, 0], sizes = [1, 32], strides = [1, 1]} : vector<8x32xf32> to vector<1x32xf32>
    %125 = vector.extract_strided_slice %120 {offsets = [4, 0], sizes = [1, 32], strides = [1, 1]} : vector<8x32xf32> to vector<1x32xf32>
    %126 = vector.extract_strided_slice %120 {offsets = [5, 0], sizes = [1, 32], strides = [1, 1]} : vector<8x32xf32> to vector<1x32xf32>
    %127 = vector.extract_strided_slice %120 {offsets = [6, 0], sizes = [1, 32], strides = [1, 1]} : vector<8x32xf32> to vector<1x32xf32>
    %128 = vector.extract_strided_slice %120 {offsets = [7, 0], sizes = [1, 32], strides = [1, 1]} : vector<8x32xf32> to vector<1x32xf32>
    %129 = tpu.concatenate %121, %122, %123, %124, %125, %126, %127, %128 in 1 : vector<1x32xf32>, vector<1x32xf32>, vector<1x32xf32>, vector<1x32xf32>, vector<1x32xf32>, vector<1x32xf32>, vector<1x32xf32>, vector<1x32xf32> -> vector<1x256xf32>
    %130 = tpu.concatenate %70, %129 in 0 : vector<1x256xf32>, vector<1x256xf32> -> vector<2x256xf32>
    %c0_43 = arith.constant 0 : index
    %c0_44 = arith.constant 0 : index
    %131 = vector.load %arg8[%c0_43, %c0_44] : memref<2x256xf32, #tpu.memory_space<vmem>>, vector<2x256xf32>
    tpu.vector_store %arg8[%c0_43, %c0_44], %130 {strides = array<i32>} : memref<2x256xf32, #tpu.memory_space<vmem>>, vector<2x256xf32>,
    return
  }
  func.func @transform_0(%arg0: i32) -> (i32, i32, i32) {
    %c0_i32 = arith.constant 0 : i32
    %c0_i32_0 = arith.constant 0 : i32
    %c0_i32_1 = arith.constant 0 : i32
    %c0_i32_2 = arith.constant 0 : i32
    return %c0_i32, %c0_i32_0, %c0_i32_1 : i32, i32, i32
  }
  func.func @transform_1(%arg0: i32) -> (i32, i32) {
    %c0_i32 = arith.constant 0 : i32
    %c0_i32_0 = arith.constant 0 : i32
    %c0_i32_1 = arith.constant 0 : i32
    return %c0_i32, %c0_i32_0 : i32, i32
  }
  func.func @transform_2(%arg0: i32) -> (i32, i32) {
    %c0_i32 = arith.constant 0 : i32
    %c0_i32_0 = arith.constant 0 : i32
    %c0_i32_1 = arith.constant 0 : i32
    return %c0_i32, %c0_i32_0 : i32, i32
  }
  func.func @transform_3(%arg0: i32) -> (i32, i32, i32) {
    %c0_i32 = arith.constant 0 : i32
    %c0_i32_0 = arith.constant 0 : i32
    %c0_i32_1 = arith.constant 0 : i32
    %c0_i32_2 = arith.constant 0 : i32
    return %c0_i32, %c0_i32_0, %c0_i32_1 : i32, i32, i32
  }
  func.func @transform_4(%arg0: i32) -> (i32, i32) {
    %c0_i32 = arith.constant 0 : i32
    %c0_i32_0 = arith.constant 0 : i32
    %c0_i32_1 = arith.constant 0 : i32
    return %c0_i32, %c0_i32_0 : i32, i32
  }
  func.func @transform_5(%arg0: i32) -> (i32, i32) {
    %c0_i32 = arith.constant 0 : i32
    %c0_i32_0 = arith.constant 0 : i32
    return %c0_i32, %arg0 : i32, i32
  }
  func.func @transform_6(%arg0: i32) -> (i32, i32, i32) {
    %c0_i32 = arith.constant 0 : i32
    %c0_i32_0 = arith.constant 0 : i32
    %c0_i32_1 = arith.constant 0 : i32
    return %arg0, %c0_i32, %c0_i32_0 : i32, i32, i32
  }
  func.func @transform_7(%arg0: i32) -> (i32, i32) {
    %c0_i32 = arith.constant 0 : i32
    %c0_i32_0 = arith.constant 0 : i32
    return %arg0, %c0_i32 : i32, i32
  }
}

</mosaic_0001>

<llo_original>
// kernel: tpu_custom_call.1
$region0: #{tpu_custom_call.1}
  #allocation0 [shape = 'u32[]', space=smem, size = 0x4, offset = 0x4, fixed_abs, tag = 'smem constant byte address 0x4 - core index']
  #allocation1 [shape = 'u32[144,128]{1,0:T(1,128)}', space=vmem, size = 0x12000, scoped, tag = 'internal scratch']
  %s0 = inlined_call_operand.vmem [shape: bf16[4,8,8], index: 0, kind: input, shape index: {}]
  %s1 = inlined_call_operand.vmem [shape: bf16[64,48], index: 1, kind: input, shape index: {}]
  %s2 = inlined_call_operand.vmem [shape: f32[64,1], index: 2, kind: input, shape index: {}]
  %s3 = inlined_call_operand.vmem [shape: bf16[4,8,32], index: 3, kind: input, shape index: {}]
  %s4 = inlined_call_operand.vmem [shape: f32[3,32], index: 4, kind: input, shape index: {}]
  %s5 = inlined_call_operand.vmem [shape: bf16[48,32], index: 5, kind: input, shape index: {}]
  %s6 = inlined_call_operand.vmem [shape: f32[2,1,16], index: 6, kind: input, shape index: {}]
  %s7 = inlined_call_operand.hbm [shape: f32[2,256], index: 7, kind: output, shape index: {}]
  %s8 = sld [smem:[#allocation0]]
  $region38: #{tpu_custom_call.1} parent=0
    _
  %s10 = ssub.s32 1, %s8
  %s11 = scalar_select 0, %s10, %s8
  $region1: #{tpu_custom_call.1} parent=0
    #allocation2 [shape = 'u8[2048]{0}', space=vmem, size = 0x800, scoped, tag = 'output window, operand 0, single buffered']
    #allocation3 [shape = 's32[1]{0}', space=sflag, size = 0x4, scoped, tag = 'scoped memory for tpu_custom_call.1']
    %12 = vsyncpa [#allocation3], 0
    // Predicated region
    $region2: #{tpu_custom_call.1} parent=1 // pred_check
      _
    $region3: #{tpu_custom_call.1} parent=1 // pred_check_branch
      %14 = sbr.rel (0) target = $region5
    $region4: #{tpu_custom_call.1} parent=1 // pred_region
      _
    $region5: #{tpu_custom_call.1} parent=1 // pred_fallthru
      _
    // Predicated region
    $region6: #{tpu_custom_call.1} parent=1 // pred_check
      _
    $region7: #{tpu_custom_call.1} parent=1 // pred_check_branch
      %16 = sbr.rel (0) target = $region9
    $region8: #{tpu_custom_call.1} parent=1 // pred_region
      _
    $region9: #{tpu_custom_call.1} parent=1 // pred_fallthru
      _
    // Predicated region
    $region10: #{tpu_custom_call.1} parent=1 // pred_check
      _
    $region11: #{tpu_custom_call.1} parent=1 // pred_check_branch
      %18 = sbr.rel (0) target = $region13
    $region12: #{tpu_custom_call.1} parent=1 // pred_region
      _
    $region13: #{tpu_custom_call.1} parent=1 // pred_fallthru
      _
    // Predicated region
    $region14: #{tpu_custom_call.1} parent=1 // pred_check
      _
    $region15: #{tpu_custom_call.1} parent=1 // pred_check_branch
      %20 = sbr.rel (0) target = $region17
    $region16: #{tpu_custom_call.1} parent=1 // pred_region
      _
    $region17: #{tpu_custom_call.1} parent=1 // pred_fallthru
      _
    // Predicated region
    $region18: #{tpu_custom_call.1} parent=1 // pred_check
      _
    $region19: #{tpu_custom_call.1} parent=1 // pred_check_branch
      %22 = sbr.rel (0) target = $region21
    $region20: #{tpu_custom_call.1} parent=1 // pred_region
      _
    $region21: #{tpu_custom_call.1} parent=1 // pred_fallthru
      _
    // Predicated region
    $region22: #{tpu_custom_call.1} parent=1 // pred_check
      _
    $region23: #{tpu_custom_call.1} parent=1 // pred_check_branch
      %24 = sbr.rel (0) target = $region25
    $region24: #{tpu_custom_call.1} parent=1 // pred_region
      _
    $region25: #{tpu_custom_call.1} parent=1 // pred_fallthru
      _
    // Predicated region
    $region26: #{tpu_custom_call.1} parent=1 // pred_check
      _
    $region27: #{tpu_custom_call.1} parent=1 // pred_check_branch
      %26 = sbr.rel (0) target = $region29
    $region28: #{tpu_custom_call.1} parent=1 // pred_region
      _
    $region29: #{tpu_custom_call.1} parent=1 // pred_fallthru
      _
    %v28 = vld [vmem:[%s1] sm:$0xf]
    %v29 = vld [vmem:[%s1 + $0x4] sm:$0xf]
    %v30 = vld [vmem:[%s1 + $0x8] sm:$0xf]
    %v31 = vld [vmem:[%s1 + $0xc] sm:$0xf]
    %v32 = vld [vmem:[%s1 + $0x10] sm:$0xf]
    %v33 = vld [vmem:[%s1 + $0x14] sm:$0xf]
    %v34 = vld [vmem:[%s1 + $0x18] sm:$0xf]
    %v35 = vld [vmem:[%s1 + $0x1c] sm:$0xf]
    %v36 = vld [vmem:[%s5] sm:$0xf]
    %v37 = vld [vmem:[%s5 + $0x4] sm:$0xf]
    %v38 = vld [vmem:[%s5 + $0x8] sm:$0xf]
    %v39 = vld [vmem:[%s5 + $0xc] sm:$0xf]
    %v40 = vld [vmem:[%s5 + $0x10] sm:$0xf]
    %v41 = vld [vmem:[%s5 + $0x14] sm:$0xf]
    %v42 = vld [vmem:[%s2] sm:$0xff]
    %v43 = vld [vmem:[%s2 + $0x8] sm:$0xff]
    %v44 = vld [vmem:[%s2 + $0x10] sm:$0xff]
    %v45 = vld [vmem:[%s2 + $0x18] sm:$0xff]
    %v46 = vld [vmem:[%s2 + $0x20] sm:$0xff]
    %v47 = vld [vmem:[%s2 + $0x28] sm:$0xff]
    %v48 = vld [vmem:[%s2 + $0x30] sm:$0xff]
    %v49 = vld [vmem:[%s2 + $0x38] sm:$0xff]
    %51 = vset.pattern.permute.xlu0 0
    %52 = vperm.xlu0 %51, %v42
    %v53 = vpop.permute.xlu0 %52
    %56 = vset.pattern.permute.xlu0 0
    %57 = vperm.xlu0 %56, %v43
    %v58 = vpop.permute.xlu0 %57
    %61 = vset.pattern.permute.xlu0 0
    %62 = vperm.xlu0 %61, %v44
    %v63 = vpop.permute.xlu0 %62
    %66 = vset.pattern.permute.xlu0 0
    %67 = vperm.xlu0 %66, %v45
    %v68 = vpop.permute.xlu0 %67
    %71 = vset.pattern.permute.xlu0 0
    %72 = vperm.xlu0 %71, %v46
    %v73 = vpop.permute.xlu0 %72
    %76 = vset.pattern.permute.xlu0 0
    %77 = vperm.xlu0 %76, %v47
    %v78 = vpop.permute.xlu0 %77
    %81 = vset.pattern.permute.xlu0 0
    %82 = vperm.xlu0 %81, %v48
    %v83 = vpop.permute.xlu0 %82
    %86 = vset.pattern.permute.xlu0 0
    %87 = vperm.xlu0 %86, %v49
    %v88 = vpop.permute.xlu0 %87
    %v98 = vunpack.c.l.b16 %v28
    %v99 = vunpack.c.l.b16 %v29
    %v100 = vunpack.c.l.b16 %v30
    %v101 = vunpack.c.l.b16 %v31
    %v102 = vunpack.c.l.b16 %v32
    %v103 = vunpack.c.l.b16 %v33
    %v104 = vunpack.c.l.b16 %v34
    %v105 = vunpack.c.l.b16 %v35
    %v106 = vpack.c.b16 %v99, %v98
    %v107 = vpack.c.b16 %v101, %v100
    %v108 = vpack.c.b16 %v103, %v102
    %v109 = vpack.c.b16 %v105, %v104
    %v116 = vunpack.c.l.b16 %v36
    %v117 = vunpack.c.l.b16 %v37
    %v118 = vunpack.c.l.b16 %v38
    %v119 = vunpack.c.l.b16 %v39
    %v120 = vunpack.c.l.b16 %v40
    %v121 = vunpack.c.l.b16 %v41
    %v122 = vpack.c.b16 %v117, %v116
    %v123 = vpack.c.b16 %v119, %v118
    %v124 = vpack.c.b16 %v121, %v120
    %vm128 = vcmask 392192
    %v130 = vsel %vm128, %v106, 0
    %v133 = vsel %vm128, %v107, 0
    %v136 = vsel %vm128, %v108, 0
    %v139 = vsel %vm128, %v109, 0
    %141 = vmatprep.subr.bf16.mxu0 0
    %142 = vmatpush1.bf16.msra.mxu0 %v122
    %143 = vmatprep.subr.bf16.mxu0 0
    %144 = vmatpush1.bf16.msra.mxu0 %v123
    %145 = vmatprep.subr.bf16.mxu0 0
    %146 = vmatpush1.bf16.msra.mxu0 %v124
    %147 = vmatprep.subr.bf16.mxu0 0
    %148 = vmatpush1.bf16.msra.mxu0 0
    %149 = vmatprep.subr.bf16.mxu0 0
    %150 = vmatpush1.bf16.msra.mxu0 0
    %151 = vmatprep.subr.bf16.mxu0 0
    %152 = vmatpush1.bf16.msra.mxu0 0
    %153 = vmatprep.subr.bf16.mxu0 0
    %154 = vmatpush1.bf16.msra.mxu0 0
    %155 = vmatprep.subr.bf16.mxu0 0
    %156 = vmatpush1.bf16.msra.mxu0 0
    %157 = vmatprep.subr.bf16.mxu0 0
    %158 = vmatpush1.bf16.msra.mxu0 0
    %159 = vmatprep.subr.bf16.mxu0 0
    %160 = vmatpush1.bf16.msra.mxu0 0
    %161 = vmatprep.subr.bf16.mxu0 0
    %162 = vmatpush1.bf16.msra.mxu0 0
    %163 = vmatprep.subr.bf16.mxu0 0
    %164 = vmatpush1.bf16.msra.mxu0 0
    %165 = vmatprep.subr.bf16.mxu0 0
    %166 = vmatpush1.bf16.msra.mxu0 0
    %167 = vmatprep.subr.bf16.mxu0 0
    %168 = vmatpush1.bf16.msra.mxu0 0
    %169 = vmatprep.subr.bf16.mxu0 0
    %170 = vmatpush1.bf16.msra.mxu0 0
    %171 = vmatprep.subr.bf16.mxu0 0
    %172 = vmatpush1.bf16.msra.mxu0 0
    %173 = vmatprep.mubr.bf16.mxu0 0
    %174 = vmatmul.mubr.bf16.gmra.mrb[0].mxu0 %v130
    %v175 = vpop.f32.mrb[0].mxu0
    %v176 = vadd.f32 %v53, %v175
    %v177 = vpop.f32.mrb[0].mxu0
    %v178 = vpop.f32.mrb[0].mxu0
    %v179 = vadd.f32 %v58, %v178
    %v180 = vpop.f32.mrb[0].mxu0
    %181 = vmatprep.mubr.bf16.mxu0 0
    %182 = vmatmul.mubr.bf16.gmra.mrb[0].mxu0 %v133
    %v183 = vpop.f32.mrb[0].mxu0
    %v184 = vadd.f32 %v63, %v183
    %v185 = vpop.f32.mrb[0].mxu0
    %v186 = vpop.f32.mrb[0].mxu0
    %v187 = vadd.f32 %v68, %v186
    %v188 = vpop.f32.mrb[0].mxu0
    %189 = vmatprep.mubr.bf16.mxu0 0
    %190 = vmatmul.mubr.bf16.gmra.mrb[0].mxu0 %v136
    %v191 = vpop.f32.mrb[0].mxu0
    %v192 = vadd.f32 %v73, %v191
    %v193 = vpop.f32.mrb[0].mxu0
    %v194 = vpop.f32.mrb[0].mxu0
    %v195 = vadd.f32 %v78, %v194
    %v196 = vpop.f32.mrb[0].mxu0
    %197 = vmatprep.mubr.bf16.mxu0 0
    %198 = vmatmul.mubr.bf16.gmra.mrb[0].mxu0 %v139
    %v199 = vpop.f32.mrb[0].mxu0
    %v200 = vadd.f32 %v83, %v199
    %v201 = vpop.f32.mrb[0].mxu0
    %v202 = vpop.f32.mrb[0].mxu0
    %v203 = vadd.f32 %v88, %v202
    %v204 = vpop.f32.mrb[0].mxu0
    %205 = vdwg.mxu0
    %v206 = vld [vmem:[%s0] sm:$0xf]
    %v207 = vld [vmem:[%s0 + $0x4] sm:$0xf]
    %v208 = vld [vmem:[%s0 + $0x8] sm:$0xf]
    %v209 = vld [vmem:[%s0 + $0xc] sm:$0xf]
    %v210 = vunpack.c.l.bf16 %v206
    %v211 = vunpack.c.l.bf16 %v207
    %v212 = vunpack.c.l.bf16 %v208
    %v213 = vunpack.c.l.bf16 %v209
    %v214 = vld [vmem:[%s3] sm:$0xf]
    %v215 = vld [vmem:[%s3 + $0x4] sm:$0xf]
    %v216 = vld [vmem:[%s3 + $0x8] sm:$0xf]
    %v217 = vld [vmem:[%s3 + $0xc] sm:$0xf]
    %v218 = vld [vmem:[%s4] sm:$0x1]
    %v219 = vld [vmem:[%s4 + $0x1] sm:$0x1]
    %v220 = vld [vmem:[%s4 + $0x2] sm:$0x1]
    %v221 = vld [vmem:[%s6] sm:$0x1]
    %v223 = vlaneseq
    %v224 = vshrl.u32 %v223, 7
    %v225 = vsub.s32 0, %v224
    %v226 = vrot.slane %v221, %v225
    %vm228 = vcmask 64512
    %v230 = vsel %vm228, %v210, 0
    %232 = vmatprep.subr.mxu0 0.0
    %233 = vmatpush1.msra.mxu0 %v176
    %234 = vmatprep.subr.mxu0 0.0
    %235 = vmatpush1.msra.mxu0 0.0
    %236 = vmatprep.subr.mxu0 0.0
    %237 = vmatpush1.msra.mxu0 0.0
    %238 = vmatprep.subr.mxu0 0.0
    %239 = vmatpush1.msra.mxu0 0.0
    %240 = vmatprep.subr.mxu0 0.0
    %241 = vmatpush1.msra.mxu0 0.0
    %242 = vmatprep.subr.mxu0 0.0
    %243 = vmatpush1.msra.mxu0 0.0
    %244 = vmatprep.subr.mxu0 0.0
    %245 = vmatpush1.msra.mxu0 0.0
    %246 = vmatprep.subr.mxu0 0.0
    %247 = vmatpush1.msra.mxu0 0.0
    %248 = vmatprep.subr.mxu0 0.0
    %249 = vmatpush1.msra.mxu0 0.0
    %250 = vmatprep.subr.mxu0 0.0
    %251 = vmatpush1.msra.mxu0 0.0
    %252 = vmatprep.subr.mxu0 0.0
    %253 = vmatpush1.msra.mxu0 0.0
    %254 = vmatprep.subr.mxu0 0.0
    %255 = vmatpush1.msra.mxu0 0.0
    %256 = vmatprep.subr.mxu0 0.0
    %257 = vmatpush1.msra.mxu0 0.0
    %258 = vmatprep.subr.mxu0 0.0
    %259 = vmatpush1.msra.mxu0 0.0
    %260 = vmatprep.subr.mxu0 0.0
    %261 = vmatpush1.msra.mxu0 0.0
    %262 = vmatprep.subr.mxu0 0.0
    %263 = vmatpush1.msra.mxu0 0.0
    %264 = vmatprep.subr.mxu0 0.0
    %265 = vmatpush1.msra.mxu0 0.0
    %266 = vmatprep.subr.mxu0 0.0
    %267 = vmatpush1.msra.mxu0 0.0
    %268 = vmatprep.subr.mxu0 0.0
    %269 = vmatpush1.msra.mxu0 0.0
    %270 = vmatprep.subr.mxu0 0.0
    %271 = vmatpush1.msra.mxu0 0.0
    %272 = vmatprep.subr.mxu0 0.0
    %273 = vmatpush1.msra.mxu0 0.0
    %274 = vmatprep.subr.mxu0 0.0
    %275 = vmatpush1.msra.mxu0 0.0
    %276 = vmatprep.subr.mxu0 0.0
    %277 = vmatpush1.msra.mxu0 0.0
    %278 = vmatprep.subr.mxu0 0.0
    %279 = vmatpush1.msra.mxu0 0.0
    %280 = vmatprep.subr.mxu0 0.0
    %281 = vmatpush1.msra.mxu0 0.0
    %282 = vmatprep.subr.mxu0 0.0
    %283 = vmatpush1.msra.mxu0 0.0
    %284 = vmatprep.subr.mxu0 0.0
    %285 = vmatpush1.msra.mxu0 0.0
    %286 = vmatprep.subr.mxu0 0.0
    %287 = vmatpush1.msra.mxu0 0.0
    %288 = vmatprep.subr.mxu0 0.0
    %289 = vmatpush1.msra.mxu0 0.0
    %290 = vmatprep.subr.mxu0 0.0
    %291 = vmatpush1.msra.mxu0 0.0
    %292 = vmatprep.subr.mxu0 0.0
    %293 = vmatpush1.msra.mxu0 0.0
    %294 = vmatprep.subr.mxu0 0.0
    %295 = vmatpush1.msra.mxu0 0.0
    %296 = vmatprep.mubr.f32.mxu0 0.0
    %297 = vmatmul.mubr.f32.gmra.mrb[0].mxu0 %v230
    %v298 = vpop.f32.mrb[0].mxu0
    %v299 = vadd.f32 %v226, %v298
    %v300 = vpop.f32.mrb[0].mxu0
    %301 = vdwg.mxu0
    %v303 = vsel %vm228, %v211, 0
    %305 = vmatprep.subr.mxu0 0.0
    %306 = vmatpush1.msra.mxu0 %v179
    %307 = vmatprep.subr.mxu0 0.0
    %308 = vmatpush1.msra.mxu0 0.0
    %309 = vmatprep.subr.mxu0 0.0
    %310 = vmatpush1.msra.mxu0 0.0
    %311 = vmatprep.subr.mxu0 0.0
    %312 = vmatpush1.msra.mxu0 0.0
    %313 = vmatprep.subr.mxu0 0.0
    %314 = vmatpush1.msra.mxu0 0.0
    %315 = vmatprep.subr.mxu0 0.0
    %316 = vmatpush1.msra.mxu0 0.0
    %317 = vmatprep.subr.mxu0 0.0
    %318 = vmatpush1.msra.mxu0 0.0
    %319 = vmatprep.subr.mxu0 0.0
    %320 = vmatpush1.msra.mxu0 0.0
    %321 = vmatprep.subr.mxu0 0.0
    %322 = vmatpush1.msra.mxu0 0.0
    %323 = vmatprep.subr.mxu0 0.0
    %324 = vmatpush1.msra.mxu0 0.0
    %325 = vmatprep.subr.mxu0 0.0
    %326 = vmatpush1.msra.mxu0 0.0
    %327 = vmatprep.subr.mxu0 0.0
    %328 = vmatpush1.msra.mxu0 0.0
    %329 = vmatprep.subr.mxu0 0.0
    %330 = vmatpush1.msra.mxu0 0.0
    %331 = vmatprep.subr.mxu0 0.0
    %332 = vmatpush1.msra.mxu0 0.0
    %333 = vmatprep.subr.mxu0 0.0
    %334 = vmatpush1.msra.mxu0 0.0
    %335 = vmatprep.subr.mxu0 0.0
    %336 = vmatpush1.msra.mxu0 0.0
    %337 = vmatprep.subr.mxu0 0.0
    %338 = vmatpush1.msra.mxu0 0.0
    %339 = vmatprep.subr.mxu0 0.0
    %340 = vmatpush1.msra.mxu0 0.0
    %341 = vmatprep.subr.mxu0 0.0
    %342 = vmatpush1.msra.mxu0 0.0
    %343 = vmatprep.subr.mxu0 0.0
    %344 = vmatpush1.msra.mxu0 0.0
    %345 = vmatprep.subr.mxu0 0.0
    %346 = vmatpush1.msra.mxu0 0.0
    %347 = vmatprep.subr.mxu0 0.0
    %348 = vmatpush1.msra.mxu0 0.0
    %349 = vmatprep.subr.mxu0 0.0
    %350 = vmatpush1.msra.mxu0 0.0
    %351 = vmatprep.subr.mxu0 0.0
    %352 = vmatpush1.msra.mxu0 0.0
    %353 = vmatprep.subr.mxu0 0.0
    %354 = vmatpush1.msra.mxu0 0.0
    %355 = vmatprep.subr.mxu0 0.0
    %356 = vmatpush1.msra.mxu0 0.0
    %357 = vmatprep.subr.mxu0 0.0
    %358 = vmatpush1.msra.mxu0 0.0
    %359 = vmatprep.subr.mxu0 0.0
    %360 = vmatpush1.msra.mxu0 0.0
    %361 = vmatprep.subr.mxu0 0.0
    %362 = vmatpush1.msra.mxu0 0.0
    %363 = vmatprep.subr.mxu0 0.0
    %364 = vmatpush1.msra.mxu0 0.0
    %365 = vmatprep.subr.mxu0 0.0
    %366 = vmatpush1.msra.mxu0 0.0
    %367 = vmatprep.subr.mxu0 0.0
    %368 = vmatpush1.msra.mxu0 0.0
    %369 = vmatprep.mubr.f32.mxu0 0.0
    %370 = vmatmul.mubr.f32.gmra.mrb[0].mxu0 %v303
    %v371 = vpop.f32.mrb[0].mxu0
    %v372 = vadd.f32 %v226, %v371
    %v373 = vpop.f32.mrb[0].mxu0
    %374 = vdwg.mxu0
    %v376 = vsel %vm228, %v212, 0
    %378 = vmatprep.subr.mxu0 0.0
    %379 = vmatpush1.msra.mxu0 %v184
    %380 = vmatprep.subr.mxu0 0.0
    %381 = vmatpush1.msra.mxu0 0.0
    %382 = vmatprep.subr.mxu0 0.0
    %383 = vmatpush1.msra.mxu0 0.0
    %384 = vmatprep.subr.mxu0 0.0
    %385 = vmatpush1.msra.mxu0 0.0
    %386 = vmatprep.subr.mxu0 0.0
    %387 = vmatpush1.msra.mxu0 0.0
    %388 = vmatprep.subr.mxu0 0.0
    %389 = vmatpush1.msra.mxu0 0.0
    %390 = vmatprep.subr.mxu0 0.0
    %391 = vmatpush1.msra.mxu0 0.0
    %392 = vmatprep.subr.mxu0 0.0
    %393 = vmatpush1.msra.mxu0 0.0
    %394 = vmatprep.subr.mxu0 0.0
    %395 = vmatpush1.msra.mxu0 0.0
    %396 = vmatprep.subr.mxu0 0.0
    %397 = vmatpush1.msra.mxu0 0.0
    %398 = vmatprep.subr.mxu0 0.0
    %399 = vmatpush1.msra.mxu0 0.0
    %400 = vmatprep.subr.mxu0 0.0
    %401 = vmatpush1.msra.mxu0 0.0
    %402 = vmatprep.subr.mxu0 0.0
    %403 = vmatpush1.msra.mxu0 0.0
    %404 = vmatprep.subr.mxu0 0.0
    %405 = vmatpush1.msra.mxu0 0.0
    %406 = vmatprep.subr.mxu0 0.0
    %407 = vmatpush1.msra.mxu0 0.0
    %408 = vmatprep.subr.mxu0 0.0
    %409 = vmatpush1.msra.mxu0 0.0
    %410 = vmatprep.subr.mxu0 0.0
    %411 = vmatpush1.msra.mxu0 0.0
    %412 = vmatprep.subr.mxu0 0.0
    %413 = vmatpush1.msra.mxu0 0.0
    %414 = vmatprep.subr.mxu0 0.0
    %415 = vmatpush1.msra.mxu0 0.0
    %416 = vmatprep.subr.mxu0 0.0
    %417 = vmatpush1.msra.mxu0 0.0
    %418 = vmatprep.subr.mxu0 0.0
    %419 = vmatpush1.msra.mxu0 0.0
    %420 = vmatprep.subr.mxu0 0.0
    %421 = vmatpush1.msra.mxu0 0.0
    %422 = vmatprep.subr.mxu0 0.0
    %423 = vmatpush1.msra.mxu0 0.0
    %424 = vmatprep.subr.mxu0 0.0
    %425 = vmatpush1.msra.mxu0 0.0
    %426 = vmatprep.subr.mxu0 0.0
    %427 = vmatpush1.msra.mxu0 0.0
    %428 = vmatprep.subr.mxu0 0.0
    %429 = vmatpush1.msra.mxu0 0.0
    %430 = vmatprep.subr.mxu0 0.0
    %431 = vmatpush1.msra.mxu0 0.0
    %432 = vmatprep.subr.mxu0 0.0
    %433 = vmatpush1.msra.mxu0 0.0
    %434 = vmatprep.subr.mxu0 0.0
    %435 = vmatpush1.msra.mxu0 0.0
    %436 = vmatprep.subr.mxu0 0.0
    %437 = vmatpush1.msra.mxu0 0.0
    %438 = vmatprep.subr.mxu0 0.0
    %439 = vmatpush1.msra.mxu0 0.0
    %440 = vmatprep.subr.mxu0 0.0
    %441 = vmatpush1.msra.mxu0 0.0
    %442 = vmatprep.mubr.f32.mxu0 0.0
    %443 = vmatmul.mubr.f32.gmra.mrb[0].mxu0 %v376
    %v444 = vpop.f32.mrb[0].mxu0
    %v445 = vadd.f32 %v226, %v444
    %v446 = vpop.f32.mrb[0].mxu0
    %447 = vdwg.mxu0
    %v449 = vsel %vm228, %v213, 0
    %451 = vmatprep.subr.mxu0 0.0
    %452 = vmatpush1.msra.mxu0 %v187
    %453 = vmatprep.subr.mxu0 0.0
    %454 = vmatpush1.msra.mxu0 0.0
    %455 = vmatprep.subr.mxu0 0.0
    %456 = vmatpush1.msra.mxu0 0.0
    %457 = vmatprep.subr.mxu0 0.0
    %458 = vmatpush1.msra.mxu0 0.0
    %459 = vmatprep.subr.mxu0 0.0
    %460 = vmatpush1.msra.mxu0 0.0
    %461 = vmatprep.subr.mxu0 0.0
    %462 = vmatpush1.msra.mxu0 0.0
    %463 = vmatprep.subr.mxu0 0.0
    %464 = vmatpush1.msra.mxu0 0.0
    %465 = vmatprep.subr.mxu0 0.0
    %466 = vmatpush1.msra.mxu0 0.0
    %467 = vmatprep.subr.mxu0 0.0
    %468 = vmatpush1.msra.mxu0 0.0
    %469 = vmatprep.subr.mxu0 0.0
    %470 = vmatpush1.msra.mxu0 0.0
    %471 = vmatprep.subr.mxu0 0.0
    %472 = vmatpush1.msra.mxu0 0.0
    %473 = vmatprep.subr.mxu0 0.0
    %474 = vmatpush1.msra.mxu0 0.0
    %475 = vmatprep.subr.mxu0 0.0
    %476 = vmatpush1.msra.mxu0 0.0
    %477 = vmatprep.subr.mxu0 0.0
    %478 = vmatpush1.msra.mxu0 0.0
    %479 = vmatprep.subr.mxu0 0.0
    %480 = vmatpush1.msra.mxu0 0.0
    %481 = vmatprep.subr.mxu0 0.0
    %482 = vmatpush1.msra.mxu0 0.0
    %483 = vmatprep.subr.mxu0 0.0
    %484 = vmatpush1.msra.mxu0 0.0
    %485 = vmatprep.subr.mxu0 0.0
    %486 = vmatpush1.msra.mxu0 0.0
    %487 = vmatprep.subr.mxu0 0.0
    %488 = vmatpush1.msra.mxu0 0.0
    %489 = vmatprep.subr.mxu0 0.0
    %490 = vmatpush1.msra.mxu0 0.0
    %491 = vmatprep.subr.mxu0 0.0
    %492 = vmatpush1.msra.mxu0 0.0
    %493 = vmatprep.subr.mxu0 0.0
    %494 = vmatpush1.msra.mxu0 0.0
    %495 = vmatprep.subr.mxu0 0.0
    %496 = vmatpush1.msra.mxu0 0.0
    %497 = vmatprep.subr.mxu0 0.0
    %498 = vmatpush1.msra.mxu0 0.0
    %499 = vmatprep.subr.mxu0 0.0
    %500 = vmatpush1.msra.mxu0 0.0
    %501 = vmatprep.subr.mxu0 0.0
    %502 = vmatpush1.msra.mxu0 0.0
    %503 = vmatprep.subr.mxu0 0.0
    %504 = vmatpush1.msra.mxu0 0.0
    %505 = vmatprep.subr.mxu0 0.0
    %506 = vmatpush1.msra.mxu0 0.0
    %507 = vmatprep.subr.mxu0 0.0
    %508 = vmatpush1.msra.mxu0 0.0
    %509 = vmatprep.subr.mxu0 0.0
    %510 = vmatpush1.msra.mxu0 0.0
    %511 = vmatprep.subr.mxu0 0.0
    %512 = vmatpush1.msra.mxu0 0.0
    %513 = vmatprep.subr.mxu0 0.0
    %514 = vmatpush1.msra.mxu0 0.0
    %515 = vmatprep.mubr.f32.mxu0 0.0
    %516 = vmatmul.mubr.f32.gmra.mrb[0].mxu0 %v449
    %v517 = vpop.f32.mrb[0].mxu0
    %v518 = vadd.f32 %v226, %v517
    %v519 = vpop.f32.mrb[0].mxu0
    %520 = vdwg.mxu0
    %vm521 = vcmask 130048
    %v522 = vsel %vm521, %v299, -inf
    %523 = vmax.xlane.f32.xlu0 %v522
    %v524 = vpop.xlane.xlu0 %523
    %v525 = vsel %vm521, %v372, -inf
    %526 = vmax.xlane.f32.xlu0 %v525
    %v527 = vpop.xlane.xlu0 %526
    %v528 = vsel %vm521, %v445, -inf
    %529 = vmax.xlane.f32.xlu0 %v528
    %v530 = vpop.xlane.xlu0 %529
    %v531 = vsel %vm521, %v518, -inf
    %532 = vmax.xlane.f32.xlu0 %v531
    %v533 = vpop.xlane.xlu0 %532
    %v534 = vsub.f32 %v299, %v524
    %v535 = vsub.f32 %v372, %v527
    %v536 = vsub.f32 %v445, %v530
    %v537 = vsub.f32 %v518, %v533
    %v538 = vmul.f32 %v534, 1.442695
    %v539 = vpow.pop %v538
    %v540 = vmul.f32 %v535, 1.442695
    %v541 = vpow.pop %v540
    %v542 = vmul.f32 %v536, 1.442695
    %v543 = vpow.pop %v542
    %v544 = vmul.f32 %v537, 1.442695
    %v545 = vpow.pop %v544
    %v546 = vsel %vm521, %v539, 0.0
    %547 = vadd.xlane.f32.xlu0 %v546
    %v548 = vpop.xlane.xlu0 %547
    %v549 = vsel %vm521, %v541, 0.0
    %550 = vadd.xlane.f32.xlu0 %v549
    %v551 = vpop.xlane.xlu0 %550
    %v552 = vsel %vm521, %v543, 0.0
    %553 = vadd.xlane.f32.xlu0 %v552
    %v554 = vpop.xlane.xlu0 %553
    %v555 = vsel %vm521, %v545, 0.0
    %556 = vadd.xlane.f32.xlu0 %v555
    %v557 = vpop.xlane.xlu0 %556
    %v558 = vrcp.pop %v548
    %v559 = vrcp.pop %v551
    %v560 = vrcp.pop %v554
    %v561 = vrcp.pop %v557
    %v562 = vmul.f32 %v539, %v558
    %v563 = vmul.f32 %v541, %v559
    %v564 = vmul.f32 %v543, %v560
    %v565 = vmul.f32 %v545, %v561
    %v567 = vsel %vm521, %v562, 0
    %v570 = vsel %vm521, %v192, 0
    %572 = vmatprep.subr.mxu0 0.0
    %573 = vmatpush1.xpose.msra.mxu0 %v570
    %574 = vmatprep.subr.mxu0 0.0
    %575 = vmatpush1.xpose.msra.mxu0 0.0
    %576 = vmatprep.subr.mxu0 0.0
    %577 = vmatpush1.xpose.msra.mxu0 0.0
    %578 = vmatprep.subr.mxu0 0.0
    %579 = vmatpush1.xpose.msra.mxu0 0.0
    %580 = vmatprep.subr.mxu0 0.0
    %581 = vmatpush1.xpose.msra.mxu0 0.0
    %582 = vmatprep.subr.mxu0 0.0
    %583 = vmatpush1.xpose.msra.mxu0 0.0
    %584 = vmatprep.subr.mxu0 0.0
    %585 = vmatpush1.xpose.msra.mxu0 0.0
    %586 = vmatprep.subr.mxu0 0.0
    %587 = vmatpush1.xpose.msra.mxu0 0.0
    %588 = vmatprep.subr.mxu0 0.0
    %589 = vmatpush1.xpose.msra.mxu0 0.0
    %590 = vmatprep.subr.mxu0 0.0
    %591 = vmatpush1.xpose.msra.mxu0 0.0
    %592 = vmatprep.subr.mxu0 0.0
    %593 = vmatpush1.xpose.msra.mxu0 0.0
    %594 = vmatprep.subr.mxu0 0.0
    %595 = vmatpush1.xpose.msra.mxu0 0.0
    %596 = vmatprep.subr.mxu0 0.0
    %597 = vmatpush1.xpose.msra.mxu0 0.0
    %598 = vmatprep.subr.mxu0 0.0
    %599 = vmatpush1.xpose.msra.mxu0 0.0
    %600 = vmatprep.subr.mxu0 0.0
    %601 = vmatpush1.xpose.msra.mxu0 0.0
    %602 = vmatprep.subr.mxu0 0.0
    %603 = vmatpush1.xpose.msra.mxu0 0.0
    %604 = vmatprep.subr.mxu0 0.0
    %605 = vmatpush1.xpose.msra.mxu0 0.0
    %606 = vmatprep.subr.mxu0 0.0
    %607 = vmatpush1.xpose.msra.mxu0 0.0
    %608 = vmatprep.subr.mxu0 0.0
    %609 = vmatpush1.xpose.msra.mxu0 0.0
    %610 = vmatprep.subr.mxu0 0.0
    %611 = vmatpush1.xpose.msra.mxu0 0.0
    %612 = vmatprep.subr.mxu0 0.0
    %613 = vmatpush1.xpose.msra.mxu0 0.0
    %614 = vmatprep.subr.mxu0 0.0
    %615 = vmatpush1.xpose.msra.mxu0 0.0
    %616 = vmatprep.subr.mxu0 0.0
    %617 = vmatpush1.xpose.msra.mxu0 0.0
    %618 = vmatprep.subr.mxu0 0.0
    %619 = vmatpush1.xpose.msra.mxu0 0.0
    %620 = vmatprep.subr.mxu0 0.0
    %621 = vmatpush1.xpose.msra.mxu0 0.0
    %622 = vmatprep.subr.mxu0 0.0
    %623 = vmatpush1.xpose.msra.mxu0 0.0
    %624 = vmatprep.subr.mxu0 0.0
    %625 = vmatpush1.xpose.msra.mxu0 0.0
    %626 = vmatprep.subr.mxu0 0.0
    %627 = vmatpush1.xpose.msra.mxu0 0.0
    %628 = vmatprep.subr.mxu0 0.0
    %629 = vmatpush1.xpose.msra.mxu0 0.0
    %630 = vmatprep.subr.mxu0 0.0
    %631 = vmatpush1.xpose.msra.mxu0 0.0
    %632 = vmatprep.subr.mxu0 0.0
    %633 = vmatpush1.xpose.msra.mxu0 0.0
    %634 = vmatprep.subr.mxu0 0.0
    %635 = vmatpush1.xpose.msra.mxu0 0.0
    %636 = vmatprep.mubr.f32.mxu0 0.0
    %637 = vmatmul.mubr.f32.gmra.mrb[0].mxu0 %v567
    %v638 = vpop.f32.mrb[0].mxu0
    %v639 = vadd.f32 0.0, %v638
    %v640 = vpop.f32.mrb[0].mxu0
    %641 = vdwg.mxu0
    %v643 = vsel %vm521, %v563, 0
    %v646 = vsel %vm521, %v195, 0
    %648 = vmatprep.subr.mxu0 0.0
    %649 = vmatpush1.xpose.msra.mxu0 %v646
    %650 = vmatprep.subr.mxu0 0.0
    %651 = vmatpush1.xpose.msra.mxu0 0.0
    %652 = vmatprep.subr.mxu0 0.0
    %653 = vmatpush1.xpose.msra.mxu0 0.0
    %654 = vmatprep.subr.mxu0 0.0
    %655 = vmatpush1.xpose.msra.mxu0 0.0
    %656 = vmatprep.subr.mxu0 0.0
    %657 = vmatpush1.xpose.msra.mxu0 0.0
    %658 = vmatprep.subr.mxu0 0.0
    %659 = vmatpush1.xpose.msra.mxu0 0.0
    %660 = vmatprep.subr.mxu0 0.0
    %661 = vmatpush1.xpose.msra.mxu0 0.0
    %662 = vmatprep.subr.mxu0 0.0
    %663 = vmatpush1.xpose.msra.mxu0 0.0
    %664 = vmatprep.subr.mxu0 0.0
    %665 = vmatpush1.xpose.msra.mxu0 0.0
    %666 = vmatprep.subr.mxu0 0.0
    %667 = vmatpush1.xpose.msra.mxu0 0.0
    %668 = vmatprep.subr.mxu0 0.0
    %669 = vmatpush1.xpose.msra.mxu0 0.0
    %670 = vmatprep.subr.mxu0 0.0
    %671 = vmatpush1.xpose.msra.mxu0 0.0
    %672 = vmatprep.subr.mxu0 0.0
    %673 = vmatpush1.xpose.msra.mxu0 0.0
    %674 = vmatprep.subr.mxu0 0.0
    %675 = vmatpush1.xpose.msra.mxu0 0.0
    %676 = vmatprep.subr.mxu0 0.0
    %677 = vmatpush1.xpose.msra.mxu0 0.0
    %678 = vmatprep.subr.mxu0 0.0
    %679 = vmatpush1.xpose.msra.mxu0 0.0
    %680 = vmatprep.subr.mxu0 0.0
    %681 = vmatpush1.xpose.msra.mxu0 0.0
    %682 = vmatprep.subr.mxu0 0.0
    %683 = vmatpush1.xpose.msra.mxu0 0.0
    %684 = vmatprep.subr.mxu0 0.0
    %685 = vmatpush1.xpose.msra.mxu0 0.0
    %686 = vmatprep.subr.mxu0 0.0
    %687 = vmatpush1.xpose.msra.mxu0 0.0
    %688 = vmatprep.subr.mxu0 0.0
    %689 = vmatpush1.xpose.msra.mxu0 0.0
    %690 = vmatprep.subr.mxu0 0.0
    %691 = vmatpush1.xpose.msra.mxu0 0.0
    %692 = vmatprep.subr.mxu0 0.0
    %693 = vmatpush1.xpose.msra.mxu0 0.0
    %694 = vmatprep.subr.mxu0 0.0
    %695 = vmatpush1.xpose.msra.mxu0 0.0
    %696 = vmatprep.subr.mxu0 0.0
    %697 = vmatpush1.xpose.msra.mxu0 0.0
    %698 = vmatprep.subr.mxu0 0.0
    %699 = vmatpush1.xpose.msra.mxu0 0.0
    %700 = vmatprep.subr.mxu0 0.0
    %701 = vmatpush1.xpose.msra.mxu0 0.0
    %702 = vmatprep.subr.mxu0 0.0
    %703 = vmatpush1.xpose.msra.mxu0 0.0
    %704 = vmatprep.subr.mxu0 0.0
    %705 = vmatpush1.xpose.msra.mxu0 0.0
    %706 = vmatprep.subr.mxu0 0.0
    %707 = vmatpush1.xpose.msra.mxu0 0.0
    %708 = vmatprep.subr.mxu0 0.0
    %709 = vmatpush1.xpose.msra.mxu0 0.0
    %710 = vmatprep.subr.mxu0 0.0
    %711 = vmatpush1.xpose.msra.mxu0 0.0
    %712 = vmatprep.mubr.f32.mxu0 0.0
    %713 = vmatmul.mubr.f32.gmra.mrb[0].mxu0 %v643
    %v714 = vpop.f32.mrb[0].mxu0
    %v715 = vadd.f32 0.0, %v714
    %v716 = vpop.f32.mrb[0].mxu0
    %717 = vdwg.mxu0
    %v719 = vsel %vm521, %v564, 0
    %v722 = vsel %vm521, %v200, 0
    %724 = vmatprep.subr.mxu0 0.0
    %725 = vmatpush1.xpose.msra.mxu0 %v722
    %726 = vmatprep.subr.mxu0 0.0
    %727 = vmatpush1.xpose.msra.mxu0 0.0
    %728 = vmatprep.subr.mxu0 0.0
    %729 = vmatpush1.xpose.msra.mxu0 0.0
    %730 = vmatprep.subr.mxu0 0.0
    %731 = vmatpush1.xpose.msra.mxu0 0.0
    %732 = vmatprep.subr.mxu0 0.0
    %733 = vmatpush1.xpose.msra.mxu0 0.0
    %734 = vmatprep.subr.mxu0 0.0
    %735 = vmatpush1.xpose.msra.mxu0 0.0
    %736 = vmatprep.subr.mxu0 0.0
    %737 = vmatpush1.xpose.msra.mxu0 0.0
    %738 = vmatprep.subr.mxu0 0.0
    %739 = vmatpush1.xpose.msra.mxu0 0.0
    %740 = vmatprep.subr.mxu0 0.0
    %741 = vmatpush1.xpose.msra.mxu0 0.0
    %742 = vmatprep.subr.mxu0 0.0
    %743 = vmatpush1.xpose.msra.mxu0 0.0
    %744 = vmatprep.subr.mxu0 0.0
    %745 = vmatpush1.xpose.msra.mxu0 0.0
    %746 = vmatprep.subr.mxu0 0.0
    %747 = vmatpush1.xpose.msra.mxu0 0.0
    %748 = vmatprep.subr.mxu0 0.0
    %749 = vmatpush1.xpose.msra.mxu0 0.0
    %750 = vmatprep.subr.mxu0 0.0
    %751 = vmatpush1.xpose.msra.mxu0 0.0
    %752 = vmatprep.subr.mxu0 0.0
    %753 = vmatpush1.xpose.msra.mxu0 0.0
    %754 = vmatprep.subr.mxu0 0.0
    %755 = vmatpush1.xpose.msra.mxu0 0.0
    %756 = vmatprep.subr.mxu0 0.0
    %757 = vmatpush1.xpose.msra.mxu0 0.0
    %758 = vmatprep.subr.mxu0 0.0
    %759 = vmatpush1.xpose.msra.mxu0 0.0
    %760 = vmatprep.subr.mxu0 0.0
    %761 = vmatpush1.xpose.msra.mxu0 0.0
    %762 = vmatprep.subr.mxu0 0.0
    %763 = vmatpush1.xpose.msra.mxu0 0.0
    %764 = vmatprep.subr.mxu0 0.0
    %765 = vmatpush1.xpose.msra.mxu0 0.0
    %766 = vmatprep.subr.mxu0 0.0
    %767 = vmatpush1.xpose.msra.mxu0 0.0
    %768 = vmatprep.subr.mxu0 0.0
    %769 = vmatpush1.xpose.msra.mxu0 0.0
    %770 = vmatprep.subr.mxu0 0.0
    %771 = vmatpush1.xpose.msra.mxu0 0.0
    %772 = vmatprep.subr.mxu0 0.0
    %773 = vmatpush1.xpose.msra.mxu0 0.0
    %774 = vmatprep.subr.mxu0 0.0
    %775 = vmatpush1.xpose.msra.mxu0 0.0
    %776 = vmatprep.subr.mxu0 0.0
    %777 = vmatpush1.xpose.msra.mxu0 0.0
    %778 = vmatprep.subr.mxu0 0.0
    %779 = vmatpush1.xpose.msra.mxu0 0.0
    %780 = vmatprep.subr.mxu0 0.0
    %781 = vmatpush1.xpose.msra.mxu0 0.0
    %782 = vmatprep.subr.mxu0 0.0
    %783 = vmatpush1.xpose.msra.mxu0 0.0
    %784 = vmatprep.subr.mxu0 0.0
    %785 = vmatpush1.xpose.msra.mxu0 0.0
    %786 = vmatprep.subr.mxu0 0.0
    %787 = vmatpush1.xpose.msra.mxu0 0.0
    %788 = vmatprep.mubr.f32.mxu0 0.0
    %789 = vmatmul.mubr.f32.gmra.mrb[0].mxu0 %v719
    %v790 = vpop.f32.mrb[0].mxu0
    %v791 = vadd.f32 0.0, %v790
    %v792 = vpop.f32.mrb[0].mxu0
    %793 = vdwg.mxu0
    %v795 = vsel %vm521, %v565, 0
    %v798 = vsel %vm521, %v203, 0
    %800 = vmatprep.subr.mxu0 0.0
    %801 = vmatpush1.xpose.msra.mxu0 %v798
    %802 = vmatprep.subr.mxu0 0.0
    %803 = vmatpush1.xpose.msra.mxu0 0.0
    %804 = vmatprep.subr.mxu0 0.0
    %805 = vmatpush1.xpose.msra.mxu0 0.0
    %806 = vmatprep.subr.mxu0 0.0
    %807 = vmatpush1.xpose.msra.mxu0 0.0
    %808 = vmatprep.subr.mxu0 0.0
    %809 = vmatpush1.xpose.msra.mxu0 0.0
    %810 = vmatprep.subr.mxu0 0.0
    %811 = vmatpush1.xpose.msra.mxu0 0.0
    %812 = vmatprep.subr.mxu0 0.0
    %813 = vmatpush1.xpose.msra.mxu0 0.0
    %814 = vmatprep.subr.mxu0 0.0
    %815 = vmatpush1.xpose.msra.mxu0 0.0
    %816 = vmatprep.subr.mxu0 0.0
    %817 = vmatpush1.xpose.msra.mxu0 0.0
    %818 = vmatprep.subr.mxu0 0.0
    %819 = vmatpush1.xpose.msra.mxu0 0.0
    %820 = vmatprep.subr.mxu0 0.0
    %821 = vmatpush1.xpose.msra.mxu0 0.0
    %822 = vmatprep.subr.mxu0 0.0
    %823 = vmatpush1.xpose.msra.mxu0 0.0
    %824 = vmatprep.subr.mxu0 0.0
    %825 = vmatpush1.xpose.msra.mxu0 0.0
    %826 = vmatprep.subr.mxu0 0.0
    %827 = vmatpush1.xpose.msra.mxu0 0.0
    %828 = vmatprep.subr.mxu0 0.0
    %829 = vmatpush1.xpose.msra.mxu0 0.0
    %830 = vmatprep.subr.mxu0 0.0
    %831 = vmatpush1.xpose.msra.mxu0 0.0
    %832 = vmatprep.subr.mxu0 0.0
    %833 = vmatpush1.xpose.msra.mxu0 0.0
    %834 = vmatprep.subr.mxu0 0.0
    %835 = vmatpush1.xpose.msra.mxu0 0.0
    %836 = vmatprep.subr.mxu0 0.0
    %837 = vmatpush1.xpose.msra.mxu0 0.0
    %838 = vmatprep.subr.mxu0 0.0
    %839 = vmatpush1.xpose.msra.mxu0 0.0
    %840 = vmatprep.subr.mxu0 0.0
    %841 = vmatpush1.xpose.msra.mxu0 0.0
    %842 = vmatprep.subr.mxu0 0.0
    %843 = vmatpush1.xpose.msra.mxu0 0.0
    %844 = vmatprep.subr.mxu0 0.0
    %845 = vmatpush1.xpose.msra.mxu0 0.0
    %846 = vmatprep.subr.mxu0 0.0
    %847 = vmatpush1.xpose.msra.mxu0 0.0
    %848 = vmatprep.subr.mxu0 0.0
    %849 = vmatpush1.xpose.msra.mxu0 0.0
    %850 = vmatprep.subr.mxu0 0.0
    %851 = vmatpush1.xpose.msra.mxu0 0.0
    %852 = vmatprep.subr.mxu0 0.0
    %853 = vmatpush1.xpose.msra.mxu0 0.0
    %854 = vmatprep.subr.mxu0 0.0
    %855 = vmatpush1.xpose.msra.mxu0 0.0
    %856 = vmatprep.subr.mxu0 0.0
    %857 = vmatpush1.xpose.msra.mxu0 0.0
    %858 = vmatprep.subr.mxu0 0.0
    %859 = vmatpush1.xpose.msra.mxu0 0.0
    %860 = vmatprep.subr.mxu0 0.0
    %861 = vmatpush1.xpose.msra.mxu0 0.0
    %862 = vmatprep.subr.mxu0 0.0
    %863 = vmatpush1.xpose.msra.mxu0 0.0
    %864 = vmatprep.mubr.f32.mxu0 0.0
    %865 = vmatmul.mubr.f32.gmra.mrb[0].mxu0 %v795
    %v866 = vpop.f32.mrb[0].mxu0
    %v867 = vadd.f32 0.0, %v866
    %v868 = vpop.f32.mrb[0].mxu0
    %869 = vdwg.mxu0
    %v870 = vpack.c.bf16 %v639, %v639
    %v871 = vpack.c.bf16 %v715, %v715
    %v872 = vpack.c.bf16 %v791, %v791
    %v873 = vpack.c.bf16 %v867, %v867
    %v875 = vsel %vm228, %v870, 0
    %vm877 = vcmask 1043456
    %v879 = vsel %vm877, %v214, 0
    %881 = vmatprep.subr.bf16.mxu0 0
    %882 = vmatpush1.bf16.msra.mxu0 %v879
    %883 = vmatprep.subr.bf16.mxu0 0
    %884 = vmatpush1.bf16.msra.mxu0 0
    %885 = vmatprep.subr.bf16.mxu0 0
    %886 = vmatpush1.bf16.msra.mxu0 0
    %887 = vmatprep.subr.bf16.mxu0 0
    %888 = vmatpush1.bf16.msra.mxu0 0
    %889 = vmatprep.subr.bf16.mxu0 0
    %890 = vmatpush1.bf16.msra.mxu0 0
    %891 = vmatprep.subr.bf16.mxu0 0
    %892 = vmatpush1.bf16.msra.mxu0 0
    %893 = vmatprep.subr.bf16.mxu0 0
    %894 = vmatpush1.bf16.msra.mxu0 0
    %895 = vmatprep.subr.bf16.mxu0 0
    %896 = vmatpush1.bf16.msra.mxu0 0
    %897 = vmatprep.subr.bf16.mxu0 0
    %898 = vmatpush1.bf16.msra.mxu0 0
    %899 = vmatprep.subr.bf16.mxu0 0
    %900 = vmatpush1.bf16.msra.mxu0 0
    %901 = vmatprep.subr.bf16.mxu0 0
    %902 = vmatpush1.bf16.msra.mxu0 0
    %903 = vmatprep.subr.bf16.mxu0 0
    %904 = vmatpush1.bf16.msra.mxu0 0
    %905 = vmatprep.subr.bf16.mxu0 0
    %906 = vmatpush1.bf16.msra.mxu0 0
    %907 = vmatprep.subr.bf16.mxu0 0
    %908 = vmatpush1.bf16.msra.mxu0 0
    %909 = vmatprep.subr.bf16.mxu0 0
    %910 = vmatpush1.bf16.msra.mxu0 0
    %911 = vmatprep.subr.bf16.mxu0 0
    %912 = vmatpush1.bf16.msra.mxu0 0
    %913 = vmatprep.mubr.bf16.mxu0 0
    %914 = vmatmul.mubr.bf16.gmra.mrb[0].mxu0 %v875
    %v915 = vpop.f32.mrb[0].mxu0
    %v916 = vadd.f32 0.0, %v915
    %v917 = vpop.f32.mrb[0].mxu0
    %v918 = vpop.f32.mrb[0].mxu0
    %v919 = vpop.f32.mrb[0].mxu0
    %920 = vdwg.mxu0
    %v922 = vsel %vm228, %v871, 0
    %v925 = vsel %vm877, %v215, 0
    %927 = vmatprep.subr.bf16.mxu0 0
    %928 = vmatpush1.bf16.msra.mxu0 %v925
    %929 = vmatprep.subr.bf16.mxu0 0
    %930 = vmatpush1.bf16.msra.mxu0 0
    %931 = vmatprep.subr.bf16.mxu0 0
    %932 = vmatpush1.bf16.msra.mxu0 0
    %933 = vmatprep.subr.bf16.mxu0 0
    %934 = vmatpush1.bf16.msra.mxu0 0
    %935 = vmatprep.subr.bf16.mxu0 0
    %936 = vmatpush1.bf16.msra.mxu0 0
    %937 = vmatprep.subr.bf16.mxu0 0
    %938 = vmatpush1.bf16.msra.mxu0 0
    %939 = vmatprep.subr.bf16.mxu0 0
    %940 = vmatpush1.bf16.msra.mxu0 0
    %941 = vmatprep.subr.bf16.mxu0 0
    %942 = vmatpush1.bf16.msra.mxu0 0
    %943 = vmatprep.subr.bf16.mxu0 0
    %944 = vmatpush1.bf16.msra.mxu0 0
    %945 = vmatprep.subr.bf16.mxu0 0
    %946 = vmatpush1.bf16.msra.mxu0 0
    %947 = vmatprep.subr.bf16.mxu0 0
    %948 = vmatpush1.bf16.msra.mxu0 0
    %949 = vmatprep.subr.bf16.mxu0 0
    %950 = vmatpush1.bf16.msra.mxu0 0
    %951 = vmatprep.subr.bf16.mxu0 0
    %952 = vmatpush1.bf16.msra.mxu0 0
    %953 = vmatprep.subr.bf16.mxu0 0
    %954 = vmatpush1.bf16.msra.mxu0 0
    %955 = vmatprep.subr.bf16.mxu0 0
    %956 = vmatpush1.bf16.msra.mxu0 0
    %957 = vmatprep.subr.bf16.mxu0 0
    %958 = vmatpush1.bf16.msra.mxu0 0
    %959 = vmatprep.mubr.bf16.mxu0 0
    %960 = vmatmul.mubr.bf16.gmra.mrb[0].mxu0 %v922
    %v961 = vpop.f32.mrb[0].mxu0
    %v962 = vadd.f32 0.0, %v961
    %v963 = vpop.f32.mrb[0].mxu0
    %v964 = vpop.f32.mrb[0].mxu0
    %v965 = vpop.f32.mrb[0].mxu0
    %966 = vdwg.mxu0
    %v968 = vsel %vm228, %v872, 0
    %v971 = vsel %vm877, %v216, 0
    %973 = vmatprep.subr.bf16.mxu0 0
    %974 = vmatpush1.bf16.msra.mxu0 %v971
    %975 = vmatprep.subr.bf16.mxu0 0
    %976 = vmatpush1.bf16.msra.mxu0 0
    %977 = vmatprep.subr.bf16.mxu0 0
    %978 = vmatpush1.bf16.msra.mxu0 0
    %979 = vmatprep.subr.bf16.mxu0 0
    %980 = vmatpush1.bf16.msra.mxu0 0
    %981 = vmatprep.subr.bf16.mxu0 0
    %982 = vmatpush1.bf16.msra.mxu0 0
    %983 = vmatprep.subr.bf16.mxu0 0
    %984 = vmatpush1.bf16.msra.mxu0 0
    %985 = vmatprep.subr.bf16.mxu0 0
    %986 = vmatpush1.bf16.msra.mxu0 0
    %987 = vmatprep.subr.bf16.mxu0 0
    %988 = vmatpush1.bf16.msra.mxu0 0
    %989 = vmatprep.subr.bf16.mxu0 0
    %990 = vmatpush1.bf16.msra.mxu0 0
    %991 = vmatprep.subr.bf16.mxu0 0
    %992 = vmatpush1.bf16.msra.mxu0 0
    %993 = vmatprep.subr.bf16.mxu0 0
    %994 = vmatpush1.bf16.msra.mxu0 0
    %995 = vmatprep.subr.bf16.mxu0 0
    %996 = vmatpush1.bf16.msra.mxu0 0
    %997 = vmatprep.subr.bf16.mxu0 0
    %998 = vmatpush1.bf16.msra.mxu0 0
    %999 = vmatprep.subr.bf16.mxu0 0
    %1000 = vmatpush1.bf16.msra.mxu0 0
    %1001 = vmatprep.subr.bf16.mxu0 0
    %1002 = vmatpush1.bf16.msra.mxu0 0
    %1003 = vmatprep.subr.bf16.mxu0 0
    %1004 = vmatpush1.bf16.msra.mxu0 0
    %1005 = vmatprep.mubr.bf16.mxu0 0
    %1006 = vmatmul.mubr.bf16.gmra.mrb[0].mxu0 %v968
    %v1007 = vpop.f32.mrb[0].mxu0
    %v1008 = vadd.f32 0.0, %v1007
    %v1009 = vpop.f32.mrb[0].mxu0
    %v1010 = vpop.f32.mrb[0].mxu0
    %v1011 = vpop.f32.mrb[0].mxu0
    %1012 = vdwg.mxu0
    %v1014 = vsel %vm228, %v873, 0
    %v1017 = vsel %vm877, %v217, 0
    %1019 = vmatprep.subr.bf16.mxu0 0
    %1020 = vmatpush1.bf16.msra.mxu0 %v1017
    %1021 = vmatprep.subr.bf16.mxu0 0
    %1022 = vmatpush1.bf16.msra.mxu0 0
    %1023 = vmatprep.subr.bf16.mxu0 0
    %1024 = vmatpush1.bf16.msra.mxu0 0
    %1025 = vmatprep.subr.bf16.mxu0 0
    %1026 = vmatpush1.bf16.msra.mxu0 0
    %1027 = vmatprep.subr.bf16.mxu0 0
    %1028 = vmatpush1.bf16.msra.mxu0 0
    %1029 = vmatprep.subr.bf16.mxu0 0
    %1030 = vmatpush1.bf16.msra.mxu0 0
    %1031 = vmatprep.subr.bf16.mxu0 0
    %1032 = vmatpush1.bf16.msra.mxu0 0
    %1033 = vmatprep.subr.bf16.mxu0 0
    %1034 = vmatpush1.bf16.msra.mxu0 0
    %1035 = vmatprep.subr.bf16.mxu0 0
    %1036 = vmatpush1.bf16.msra.mxu0 0
    %1037 = vmatprep.subr.bf16.mxu0 0
    %1038 = vmatpush1.bf16.msra.mxu0 0
    %1039 = vmatprep.subr.bf16.mxu0 0
    %1040 = vmatpush1.bf16.msra.mxu0 0
    %1041 = vmatprep.subr.bf16.mxu0 0
    %1042 = vmatpush1.bf16.msra.mxu0 0
    %1043 = vmatprep.subr.bf16.mxu0 0
    %1044 = vmatpush1.bf16.msra.mxu0 0
    %1045 = vmatprep.subr.bf16.mxu0 0
    %1046 = vmatpush1.bf16.msra.mxu0 0
    %1047 = vmatprep.subr.bf16.mxu0 0
    %1048 = vmatpush1.bf16.msra.mxu0 0
    %1049 = vmatprep.subr.bf16.mxu0 0
    %1050 = vmatpush1.bf16.msra.mxu0 0
    %1051 = vmatprep.mubr.bf16.mxu0 0
    %1052 = vmatmul.mubr.bf16.gmra.mrb[0].mxu0 %v1014
    %v1053 = vpop.f32.mrb[0].mxu0
    %v1054 = vadd.f32 0.0, %v1053
    %v1055 = vpop.f32.mrb[0].mxu0
    %v1056 = vpop.f32.mrb[0].mxu0
    %v1057 = vpop.f32.mrb[0].mxu0
    %1058 = vdwg.mxu0
    %vm1059 = vcmask 261120
    %v1060 = vsel %vm1059, %v916, 0.0
    %v1061 = vsel %vm1059, %v962, 0.0
    %v1062 = vadd.f32 %v1060, %v1061
    %v1063 = vsel %vm1059, %v1008, 0.0
    %v1064 = vadd.f32 %v1062, %v1063
    %v1065 = vsel %vm1059, %v1054, 0.0
    %v1066 = vadd.f32 %v1064, %v1065
    %v1067 = vlaneseq
    %v1068 = vshrl.u32 %v1067, 7
    %v1069 = vsub.s32 0, %v1068
    %v1070 = vrot.slane %v218, %v1069
    %v1071 = vadd.f32 %v1066, %v1070
    %v1072 = vsel %vm1059, %v1071, 0.0
    %1073 = vadd.xlane.f32.xlu0 %v1072
    %v1074 = vpop.xlane.xlu0 %1073
    %v1075 = vrcp.pop 32.0
    %v1076 = vmul.f32 %v1074, %v1075
    %v1077 = vsub.f32 %v1071, %v1076
    %v1078 = vmul.f32 %v1077, %v1077
    %v1079 = vsel %vm1059, %v1078, 0.0
    %1080 = vadd.xlane.f32.xlu0 %v1079
    %v1081 = vpop.xlane.xlu0 %1080
    %v1082 = vmul.f32 %v1081, %v1075
    %v1083 = vadd.f32 %v1082, 1e-05
    %v1084 = vrsqrt.pop %v1083
    %v1085 = vmul.f32 %v1077, %v1084
    %v1086 = vlaneseq
    %v1087 = vshrl.u32 %v1086, 7
    %v1088 = vsub.s32 0, %v1087
    %v1089 = vrot.slane %v219, %v1088
    %v1090 = vmul.f32 %v1085, %v1089
    %v1091 = vlaneseq
    %v1092 = vshrl.u32 %v1091, 7
    %v1093 = vsub.s32 0, %v1092
    %v1094 = vrot.slane %v220, %v1093
    %v1095 = vadd.f32 %v1090, %v1094
    %v1097 = vrot.slane %v1095, 1
    %1098 = vrot.lane.b32.xlu0 %v1097, 32
    %v1099 = vpop.permute.xlu0 %1098
    %v1101 = vrot.slane %v1095, 2
    %1102 = vrot.lane.b32.xlu0 %v1101, 64
    %v1103 = vpop.permute.xlu0 %1102
    %v1105 = vrot.slane %v1095, 3
    %1106 = vrot.lane.b32.xlu0 %v1105, 96
    %v1107 = vpop.permute.xlu0 %1106
    %v1109 = vrot.slane %v1095, 4
    %v1111 = vrot.slane %v1095, 5
    %1112 = vrot.lane.b32.xlu0 %v1111, 32
    %v1113 = vpop.permute.xlu0 %1112
    %v1115 = vrot.slane %v1095, 6
    %1116 = vrot.lane.b32.xlu0 %v1115, 64
    %v1117 = vpop.permute.xlu0 %1116
    %v1119 = vrot.slane %v1095, 7
    %1120 = vrot.lane.b32.xlu0 %v1119, 96
    %v1121 = vpop.permute.xlu0 %1120
    %v1123 = vsel %vm1059, %v1095, %v1099
    %vm1124 = vcmask 523264
    %v1125 = vsel %vm1124, %v1123, %v1103
    %vm1126 = vcmask 785408
    %v1127 = vsel %vm1126, %v1125, %v1107
    %v1128 = vsel %vm1059, %v1109, %v1113
    %v1129 = vsel %vm1124, %v1128, %v1117
    %v1130 = vsel %vm1126, %v1129, %v1121
    %s1131 = scalar_lea.vmem %s6, 1
    %v1132 = vld [vmem:[%s1131] sm:$0x1]
    %v1134 = vlaneseq
    %v1135 = vshrl.u32 %v1134, 7
    %v1136 = vsub.s32 0, %v1135
    %v1137 = vrot.slane %v1132, %v1136
    %1140 = vrot.lane.b32.xlu0 %v176, 112
    %v1141 = vpop.permute.xlu0 %1140
    %1143 = vmatprep.subr.mxu0 0.0
    %1144 = vmatpush1.msra.mxu0 %v1141
    %1145 = vmatprep.subr.mxu0 0.0
    %1146 = vmatpush1.msra.mxu0 0.0
    %1147 = vmatprep.subr.mxu0 0.0
    %1148 = vmatpush1.msra.mxu0 0.0
    %1149 = vmatprep.subr.mxu0 0.0
    %1150 = vmatpush1.msra.mxu0 0.0
    %1151 = vmatprep.subr.mxu0 0.0
    %1152 = vmatpush1.msra.mxu0 0.0
    %1153 = vmatprep.subr.mxu0 0.0
    %1154 = vmatpush1.msra.mxu0 0.0
    %1155 = vmatprep.subr.mxu0 0.0
    %1156 = vmatpush1.msra.mxu0 0.0
    %1157 = vmatprep.subr.mxu0 0.0
    %1158 = vmatpush1.msra.mxu0 0.0
    %1159 = vmatprep.subr.mxu0 0.0
    %1160 = vmatpush1.msra.mxu0 0.0
    %1161 = vmatprep.subr.mxu0 0.0
    %1162 = vmatpush1.msra.mxu0 0.0
    %1163 = vmatprep.subr.mxu0 0.0
    %1164 = vmatpush1.msra.mxu0 0.0
    %1165 = vmatprep.subr.mxu0 0.0
    %1166 = vmatpush1.msra.mxu0 0.0
    %1167 = vmatprep.subr.mxu0 0.0
    %1168 = vmatpush1.msra.mxu0 0.0
    %1169 = vmatprep.subr.mxu0 0.0
    %1170 = vmatpush1.msra.mxu0 0.0
    %1171 = vmatprep.subr.mxu0 0.0
    %1172 = vmatpush1.msra.mxu0 0.0
    %1173 = vmatprep.subr.mxu0 0.0
    %1174 = vmatpush1.msra.mxu0 0.0
    %1175 = vmatprep.subr.mxu0 0.0
    %1176 = vmatpush1.msra.mxu0 0.0
    %1177 = vmatprep.subr.mxu0 0.0
    %1178 = vmatpush1.msra.mxu0 0.0
    %1179 = vmatprep.subr.mxu0 0.0
    %1180 = vmatpush1.msra.mxu0 0.0
    %1181 = vmatprep.subr.mxu0 0.0
    %1182 = vmatpush1.msra.mxu0 0.0
    %1183 = vmatprep.subr.mxu0 0.0
    %1184 = vmatpush1.msra.mxu0 0.0
    %1185 = vmatprep.subr.mxu0 0.0
    %1186 = vmatpush1.msra.mxu0 0.0
    %1187 = vmatprep.subr.mxu0 0.0
    %1188 = vmatpush1.msra.mxu0 0.0
    %1189 = vmatprep.subr.mxu0 0.0
    %1190 = vmatpush1.msra.mxu0 0.0
    %1191 = vmatprep.subr.mxu0 0.0
    %1192 = vmatpush1.msra.mxu0 0.0
    %1193 = vmatprep.subr.mxu0 0.0
    %1194 = vmatpush1.msra.mxu0 0.0
    %1195 = vmatprep.subr.mxu0 0.0
    %1196 = vmatpush1.msra.mxu0 0.0
    %1197 = vmatprep.subr.mxu0 0.0
    %1198 = vmatpush1.msra.mxu0 0.0
    %1199 = vmatprep.subr.mxu0 0.0
    %1200 = vmatpush1.msra.mxu0 0.0
    %1201 = vmatprep.subr.mxu0 0.0
    %1202 = vmatpush1.msra.mxu0 0.0
    %1203 = vmatprep.subr.mxu0 0.0
    %1204 = vmatpush1.msra.mxu0 0.0
    %1205 = vmatprep.subr.mxu0 0.0
    %1206 = vmatpush1.msra.mxu0 0.0
    %1207 = vmatprep.mubr.f32.mxu0 0.0
    %1208 = vmatmul.mubr.f32.gmra.mrb[0].mxu0 %v230
    %v1209 = vpop.f32.mrb[0].mxu0
    %v1210 = vadd.f32 %v1137, %v1209
    %v1211 = vpop.f32.mrb[0].mxu0
    %1212 = vdwg.mxu0
    %1214 = vrot.lane.b32.xlu0 %v179, 112
    %v1215 = vpop.permute.xlu0 %1214
    %1217 = vmatprep.subr.mxu0 0.0
    %1218 = vmatpush1.msra.mxu0 %v1215
    %1219 = vmatprep.subr.mxu0 0.0
    %1220 = vmatpush1.msra.mxu0 0.0
    %1221 = vmatprep.subr.mxu0 0.0
    %1222 = vmatpush1.msra.mxu0 0.0
    %1223 = vmatprep.subr.mxu0 0.0
    %1224 = vmatpush1.msra.mxu0 0.0
    %1225 = vmatprep.subr.mxu0 0.0
    %1226 = vmatpush1.msra.mxu0 0.0
    %1227 = vmatprep.subr.mxu0 0.0
    %1228 = vmatpush1.msra.mxu0 0.0
    %1229 = vmatprep.subr.mxu0 0.0
    %1230 = vmatpush1.msra.mxu0 0.0
    %1231 = vmatprep.subr.mxu0 0.0
    %1232 = vmatpush1.msra.mxu0 0.0
    %1233 = vmatprep.subr.mxu0 0.0
    %1234 = vmatpush1.msra.mxu0 0.0
    %1235 = vmatprep.subr.mxu0 0.0
    %1236 = vmatpush1.msra.mxu0 0.0
    %1237 = vmatprep.subr.mxu0 0.0
    %1238 = vmatpush1.msra.mxu0 0.0
    %1239 = vmatprep.subr.mxu0 0.0
    %1240 = vmatpush1.msra.mxu0 0.0
    %1241 = vmatprep.subr.mxu0 0.0
    %1242 = vmatpush1.msra.mxu0 0.0
    %1243 = vmatprep.subr.mxu0 0.0
    %1244 = vmatpush1.msra.mxu0 0.0
    %1245 = vmatprep.subr.mxu0 0.0
    %1246 = vmatpush1.msra.mxu0 0.0
    %1247 = vmatprep.subr.mxu0 0.0
    %1248 = vmatpush1.msra.mxu0 0.0
    %1249 = vmatprep.subr.mxu0 0.0
    %1250 = vmatpush1.msra.mxu0 0.0
    %1251 = vmatprep.subr.mxu0 0.0
    %1252 = vmatpush1.msra.mxu0 0.0
    %1253 = vmatprep.subr.mxu0 0.0
    %1254 = vmatpush1.msra.mxu0 0.0
    %1255 = vmatprep.subr.mxu0 0.0
    %1256 = vmatpush1.msra.mxu0 0.0
    %1257 = vmatprep.subr.mxu0 0.0
    %1258 = vmatpush1.msra.mxu0 0.0
    %1259 = vmatprep.subr.mxu0 0.0
    %1260 = vmatpush1.msra.mxu0 0.0
    %1261 = vmatprep.subr.mxu0 0.0
    %1262 = vmatpush1.msra.mxu0 0.0
    %1263 = vmatprep.subr.mxu0 0.0
    %1264 = vmatpush1.msra.mxu0 0.0
    %1265 = vmatprep.subr.mxu0 0.0
    %1266 = vmatpush1.msra.mxu0 0.0
    %1267 = vmatprep.subr.mxu0 0.0
    %1268 = vmatpush1.msra.mxu0 0.0
    %1269 = vmatprep.subr.mxu0 0.0
    %1270 = vmatpush1.msra.mxu0 0.0
    %1271 = vmatprep.subr.mxu0 0.0
    %1272 = vmatpush1.msra.mxu0 0.0
    %1273 = vmatprep.subr.mxu0 0.0
    %1274 = vmatpush1.msra.mxu0 0.0
    %1275 = vmatprep.subr.mxu0 0.0
    %1276 = vmatpush1.msra.mxu0 0.0
    %1277 = vmatprep.subr.mxu0 0.0
    %1278 = vmatpush1.msra.mxu0 0.0
    %1279 = vmatprep.subr.mxu0 0.0
    %1280 = vmatpush1.msra.mxu0 0.0
    %1281 = vmatprep.mubr.f32.mxu0 0.0
    %1282 = vmatmul.mubr.f32.gmra.mrb[0].mxu0 %v303
    %v1283 = vpop.f32.mrb[0].mxu0
    %v1284 = vadd.f32 %v1137, %v1283
    %v1285 = vpop.f32.mrb[0].mxu0
    %1286 = vdwg.mxu0
    %1288 = vrot.lane.b32.xlu0 %v184, 112
    %v1289 = vpop.permute.xlu0 %1288
    %1291 = vmatprep.subr.mxu0 0.0
    %1292 = vmatpush1.msra.mxu0 %v1289
    %1293 = vmatprep.subr.mxu0 0.0
    %1294 = vmatpush1.msra.mxu0 0.0
    %1295 = vmatprep.subr.mxu0 0.0
    %1296 = vmatpush1.msra.mxu0 0.0
    %1297 = vmatprep.subr.mxu0 0.0
    %1298 = vmatpush1.msra.mxu0 0.0
    %1299 = vmatprep.subr.mxu0 0.0
    %1300 = vmatpush1.msra.mxu0 0.0
    %1301 = vmatprep.subr.mxu0 0.0
    %1302 = vmatpush1.msra.mxu0 0.0
    %1303 = vmatprep.subr.mxu0 0.0
    %1304 = vmatpush1.msra.mxu0 0.0
    %1305 = vmatprep.subr.mxu0 0.0
    %1306 = vmatpush1.msra.mxu0 0.0
    %1307 = vmatprep.subr.mxu0 0.0
    %1308 = vmatpush1.msra.mxu0 0.0
    %1309 = vmatprep.subr.mxu0 0.0
    %1310 = vmatpush1.msra.mxu0 0.0
    %1311 = vmatprep.subr.mxu0 0.0
    %1312 = vmatpush1.msra.mxu0 0.0
    %1313 = vmatprep.subr.mxu0 0.0
    %1314 = vmatpush1.msra.mxu0 0.0
    %1315 = vmatprep.subr.mxu0 0.0
    %1316 = vmatpush1.msra.mxu0 0.0
    %1317 = vmatprep.subr.mxu0 0.0
    %1318 = vmatpush1.msra.mxu0 0.0
    %1319 = vmatprep.subr.mxu0 0.0
    %1320 = vmatpush1.msra.mxu0 0.0
    %1321 = vmatprep.subr.mxu0 0.0
    %1322 = vmatpush1.msra.mxu0 0.0
    %1323 = vmatprep.subr.mxu0 0.0
    %1324 = vmatpush1.msra.mxu0 0.0
    %1325 = vmatprep.subr.mxu0 0.0
    %1326 = vmatpush1.msra.mxu0 0.0
    %1327 = vmatprep.subr.mxu0 0.0
    %1328 = vmatpush1.msra.mxu0 0.0
    %1329 = vmatprep.subr.mxu0 0.0
    %1330 = vmatpush1.msra.mxu0 0.0
    %1331 = vmatprep.subr.mxu0 0.0
    %1332 = vmatpush1.msra.mxu0 0.0
    %1333 = vmatprep.subr.mxu0 0.0
    %1334 = vmatpush1.msra.mxu0 0.0
    %1335 = vmatprep.subr.mxu0 0.0
    %1336 = vmatpush1.msra.mxu0 0.0
    %1337 = vmatprep.subr.mxu0 0.0
    %1338 = vmatpush1.msra.mxu0 0.0
    %1339 = vmatprep.subr.mxu0 0.0
    %1340 = vmatpush1.msra.mxu0 0.0
    %1341 = vmatprep.subr.mxu0 0.0
    %1342 = vmatpush1.msra.mxu0 0.0
    %1343 = vmatprep.subr.mxu0 0.0
    %1344 = vmatpush1.msra.mxu0 0.0
    %1345 = vmatprep.subr.mxu0 0.0
    %1346 = vmatpush1.msra.mxu0 0.0
    %1347 = vmatprep.subr.mxu0 0.0
    %1348 = vmatpush1.msra.mxu0 0.0
    %1349 = vmatprep.subr.mxu0 0.0
    %1350 = vmatpush1.msra.mxu0 0.0
    %1351 = vmatprep.subr.mxu0 0.0
    %1352 = vmatpush1.msra.mxu0 0.0
    %1353 = vmatprep.subr.mxu0 0.0
    %1354 = vmatpush1.msra.mxu0 0.0
    %1355 = vmatprep.mubr.f32.mxu0 0.0
    %1356 = vmatmul.mubr.f32.gmra.mrb[0].mxu0 %v376
    %v1357 = vpop.f32.mrb[0].mxu0
    %v1358 = vadd.f32 %v1137, %v1357
    %v1359 = vpop.f32.mrb[0].mxu0
    %1360 = vdwg.mxu0
    %1362 = vrot.lane.b32.xlu0 %v187, 112
    %v1363 = vpop.permute.xlu0 %1362
    %1365 = vmatprep.subr.mxu0 0.0
    %1366 = vmatpush1.msra.mxu0 %v1363
    %1367 = vmatprep.subr.mxu0 0.0
    %1368 = vmatpush1.msra.mxu0 0.0
    %1369 = vmatprep.subr.mxu0 0.0
    %1370 = vmatpush1.msra.mxu0 0.0
    %1371 = vmatprep.subr.mxu0 0.0
    %1372 = vmatpush1.msra.mxu0 0.0
    %1373 = vmatprep.subr.mxu0 0.0
    %1374 = vmatpush1.msra.mxu0 0.0
    %1375 = vmatprep.subr.mxu0 0.0
    %1376 = vmatpush1.msra.mxu0 0.0
    %1377 = vmatprep.subr.mxu0 0.0
    %1378 = vmatpush1.msra.mxu0 0.0
    %1379 = vmatprep.subr.mxu0 0.0
    %1380 = vmatpush1.msra.mxu0 0.0
    %1381 = vmatprep.subr.mxu0 0.0
    %1382 = vmatpush1.msra.mxu0 0.0
    %1383 = vmatprep.subr.mxu0 0.0
    %1384 = vmatpush1.msra.mxu0 0.0
    %1385 = vmatprep.subr.mxu0 0.0
    %1386 = vmatpush1.msra.mxu0 0.0
    %1387 = vmatprep.subr.mxu0 0.0
    %1388 = vmatpush1.msra.mxu0 0.0
    %1389 = vmatprep.subr.mxu0 0.0
    %1390 = vmatpush1.msra.mxu0 0.0
    %1391 = vmatprep.subr.mxu0 0.0
    %1392 = vmatpush1.msra.mxu0 0.0
    %1393 = vmatprep.subr.mxu0 0.0
    %1394 = vmatpush1.msra.mxu0 0.0
    %1395 = vmatprep.subr.mxu0 0.0
    %1396 = vmatpush1.msra.mxu0 0.0
    %1397 = vmatprep.subr.mxu0 0.0
    %1398 = vmatpush1.msra.mxu0 0.0
    %1399 = vmatprep.subr.mxu0 0.0
    %1400 = vmatpush1.msra.mxu0 0.0
    %1401 = vmatprep.subr.mxu0 0.0
    %1402 = vmatpush1.msra.mxu0 0.0
    %1403 = vmatprep.subr.mxu0 0.0
    %1404 = vmatpush1.msra.mxu0 0.0
    %1405 = vmatprep.subr.mxu0 0.0
    %1406 = vmatpush1.msra.mxu0 0.0
    %1407 = vmatprep.subr.mxu0 0.0
    %1408 = vmatpush1.msra.mxu0 0.0
    %1409 = vmatprep.subr.mxu0 0.0
    %1410 = vmatpush1.msra.mxu0 0.0
    %1411 = vmatprep.subr.mxu0 0.0
    %1412 = vmatpush1.msra.mxu0 0.0
    %1413 = vmatprep.subr.mxu0 0.0
    %1414 = vmatpush1.msra.mxu0 0.0
    %1415 = vmatprep.subr.mxu0 0.0
    %1416 = vmatpush1.msra.mxu0 0.0
    %1417 = vmatprep.subr.mxu0 0.0
    %1418 = vmatpush1.msra.mxu0 0.0
    %1419 = vmatprep.subr.mxu0 0.0
    %1420 = vmatpush1.msra.mxu0 0.0
    %1421 = vmatprep.subr.mxu0 0.0
    %1422 = vmatpush1.msra.mxu0 0.0
    %1423 = vmatprep.subr.mxu0 0.0
    %1424 = vmatpush1.msra.mxu0 0.0
    %1425 = vmatprep.subr.mxu0 0.0
    %1426 = vmatpush1.msra.mxu0 0.0
    %1427 = vmatprep.subr.mxu0 0.0
    %1428 = vmatpush1.msra.mxu0 0.0
    %1429 = vmatprep.mubr.f32.mxu0 0.0
    %1430 = vmatmul.mubr.f32.gmra.mrb[0].mxu0 %v449
    %v1431 = vpop.f32.mrb[0].mxu0
    %v1432 = vadd.f32 %v1137, %v1431
    %v1433 = vpop.f32.mrb[0].mxu0
    %1434 = vdwg.mxu0
    %v1435 = vsel %vm521, %v1210, -inf
    %1436 = vmax.xlane.f32.xlu0 %v1435
    %v1437 = vpop.xlane.xlu0 %1436
    %v1438 = vsel %vm521, %v1284, -inf
    %1439 = vmax.xlane.f32.xlu0 %v1438
    %v1440 = vpop.xlane.xlu0 %1439
    %v1441 = vsel %vm521, %v1358, -inf
    %1442 = vmax.xlane.f32.xlu0 %v1441
    %v1443 = vpop.xlane.xlu0 %1442
    %v1444 = vsel %vm521, %v1432, -inf
    %1445 = vmax.xlane.f32.xlu0 %v1444
    %v1446 = vpop.xlane.xlu0 %1445
    %v1447 = vsub.f32 %v1210, %v1437
    %v1448 = vsub.f32 %v1284, %v1440
    %v1449 = vsub.f32 %v1358, %v1443
    %v1450 = vsub.f32 %v1432, %v1446
    %v1451 = vmul.f32 %v1447, 1.442695
    %v1452 = vpow.pop %v1451
    %v1453 = vmul.f32 %v1448, 1.442695
    %v1454 = vpow.pop %v1453
    %v1455 = vmul.f32 %v1449, 1.442695
    %v1456 = vpow.pop %v1455
    %v1457 = vmul.f32 %v1450, 1.442695
    %v1458 = vpow.pop %v1457
    %v1459 = vsel %vm521, %v1452, 0.0
    %1460 = vadd.xlane.f32.xlu0 %v1459
    %v1461 = vpop.xlane.xlu0 %1460
    %v1462 = vsel %vm521, %v1454, 0.0
    %1463 = vadd.xlane.f32.xlu0 %v1462
    %v1464 = vpop.xlane.xlu0 %1463
    %v1465 = vsel %vm521, %v1456, 0.0
    %1466 = vadd.xlane.f32.xlu0 %v1465
    %v1467 = vpop.xlane.xlu0 %1466
    %v1468 = vsel %vm521, %v1458, 0.0
    %1469 = vadd.xlane.f32.xlu0 %v1468
    %v1470 = vpop.xlane.xlu0 %1469
    %v1471 = vrcp.pop %v1461
    %v1472 = vrcp.pop %v1464
    %v1473 = vrcp.pop %v1467
    %v1474 = vrcp.pop %v1470
    %v1475 = vmul.f32 %v1452, %v1471
    %v1476 = vmul.f32 %v1454, %v1472
    %v1477 = vmul.f32 %v1456, %v1473
    %v1478 = vmul.f32 %v1458, %v1474
    %1479 = vrot.lane.b32.xlu0 %v192, 112
    %v1480 = vpop.permute.xlu0 %1479
    %v1482 = vsel %vm521, %v1475, 0
    %v1484 = vsel %vm521, %v1480, 0
    %1486 = vmatprep.subr.mxu0 0.0
    %1487 = vmatpush1.xpose.msra.mxu0 %v1484
    %1488 = vmatprep.subr.mxu0 0.0
    %1489 = vmatpush1.xpose.msra.mxu0 0.0
    %1490 = vmatprep.subr.mxu0 0.0
    %1491 = vmatpush1.xpose.msra.mxu0 0.0
    %1492 = vmatprep.subr.mxu0 0.0
    %1493 = vmatpush1.xpose.msra.mxu0 0.0
    %1494 = vmatprep.subr.mxu0 0.0
    %1495 = vmatpush1.xpose.msra.mxu0 0.0
    %1496 = vmatprep.subr.mxu0 0.0
    %1497 = vmatpush1.xpose.msra.mxu0 0.0
    %1498 = vmatprep.subr.mxu0 0.0
    %1499 = vmatpush1.xpose.msra.mxu0 0.0
    %1500 = vmatprep.subr.mxu0 0.0
    %1501 = vmatpush1.xpose.msra.mxu0 0.0
    %1502 = vmatprep.subr.mxu0 0.0
    %1503 = vmatpush1.xpose.msra.mxu0 0.0
    %1504 = vmatprep.subr.mxu0 0.0
    %1505 = vmatpush1.xpose.msra.mxu0 0.0
    %1506 = vmatprep.subr.mxu0 0.0
    %1507 = vmatpush1.xpose.msra.mxu0 0.0
    %1508 = vmatprep.subr.mxu0 0.0
    %1509 = vmatpush1.xpose.msra.mxu0 0.0
    %1510 = vmatprep.subr.mxu0 0.0
    %1511 = vmatpush1.xpose.msra.mxu0 0.0
    %1512 = vmatprep.subr.mxu0 0.0
    %1513 = vmatpush1.xpose.msra.mxu0 0.0
    %1514 = vmatprep.subr.mxu0 0.0
    %1515 = vmatpush1.xpose.msra.mxu0 0.0
    %1516 = vmatprep.subr.mxu0 0.0
    %1517 = vmatpush1.xpose.msra.mxu0 0.0
    %1518 = vmatprep.subr.mxu0 0.0
    %1519 = vmatpush1.xpose.msra.mxu0 0.0
    %1520 = vmatprep.subr.mxu0 0.0
    %1521 = vmatpush1.xpose.msra.mxu0 0.0
    %1522 = vmatprep.subr.mxu0 0.0
    %1523 = vmatpush1.xpose.msra.mxu0 0.0
    %1524 = vmatprep.subr.mxu0 0.0
    %1525 = vmatpush1.xpose.msra.mxu0 0.0
    %1526 = vmatprep.subr.mxu0 0.0
    %1527 = vmatpush1.xpose.msra.mxu0 0.0
    %1528 = vmatprep.subr.mxu0 0.0
    %1529 = vmatpush1.xpose.msra.mxu0 0.0
    %1530 = vmatprep.subr.mxu0 0.0
    %1531 = vmatpush1.xpose.msra.mxu0 0.0
    %1532 = vmatprep.subr.mxu0 0.0
    %1533 = vmatpush1.xpose.msra.mxu0 0.0
    %1534 = vmatprep.subr.mxu0 0.0
    %1535 = vmatpush1.xpose.msra.mxu0 0.0
    %1536 = vmatprep.subr.mxu0 0.0
    %1537 = vmatpush1.xpose.msra.mxu0 0.0
    %1538 = vmatprep.subr.mxu0 0.0
    %1539 = vmatpush1.xpose.msra.mxu0 0.0
    %1540 = vmatprep.subr.mxu0 0.0
    %1541 = vmatpush1.xpose.msra.mxu0 0.0
    %1542 = vmatprep.subr.mxu0 0.0
    %1543 = vmatpush1.xpose.msra.mxu0 0.0
    %1544 = vmatprep.subr.mxu0 0.0
    %1545 = vmatpush1.xpose.msra.mxu0 0.0
    %1546 = vmatprep.subr.mxu0 0.0
    %1547 = vmatpush1.xpose.msra.mxu0 0.0
    %1548 = vmatprep.subr.mxu0 0.0
    %1549 = vmatpush1.xpose.msra.mxu0 0.0
    %1550 = vmatprep.mubr.f32.mxu0 0.0
    %1551 = vmatmul.mubr.f32.gmra.mrb[0].mxu0 %v1482
    %v1552 = vpop.f32.mrb[0].mxu0
    %v1553 = vadd.f32 0.0, %v1552
    %v1554 = vpop.f32.mrb[0].mxu0
    %1555 = vdwg.mxu0
    %1556 = vrot.lane.b32.xlu0 %v195, 112
    %v1557 = vpop.permute.xlu0 %1556
    %v1559 = vsel %vm521, %v1476, 0
    %v1561 = vsel %vm521, %v1557, 0
    %1563 = vmatprep.subr.mxu0 0.0
    %1564 = vmatpush1.xpose.msra.mxu0 %v1561
    %1565 = vmatprep.subr.mxu0 0.0
    %1566 = vmatpush1.xpose.msra.mxu0 0.0
    %1567 = vmatprep.subr.mxu0 0.0
    %1568 = vmatpush1.xpose.msra.mxu0 0.0
    %1569 = vmatprep.subr.mxu0 0.0
    %1570 = vmatpush1.xpose.msra.mxu0 0.0
    %1571 = vmatprep.subr.mxu0 0.0
    %1572 = vmatpush1.xpose.msra.mxu0 0.0
    %1573 = vmatprep.subr.mxu0 0.0
    %1574 = vmatpush1.xpose.msra.mxu0 0.0
    %1575 = vmatprep.subr.mxu0 0.0
    %1576 = vmatpush1.xpose.msra.mxu0 0.0
    %1577 = vmatprep.subr.mxu0 0.0
    %1578 = vmatpush1.xpose.msra.mxu0 0.0
    %1579 = vmatprep.subr.mxu0 0.0
    %1580 = vmatpush1.xpose.msra.mxu0 0.0
    %1581 = vmatprep.subr.mxu0 0.0
    %1582 = vmatpush1.xpose.msra.mxu0 0.0
    %1583 = vmatprep.subr.mxu0 0.0
    %1584 = vmatpush1.xpose.msra.mxu0 0.0
    %1585 = vmatprep.subr.mxu0 0.0
    %1586 = vmatpush1.xpose.msra.mxu0 0.0
    %1587 = vmatprep.subr.mxu0 0.0
    %1588 = vmatpush1.xpose.msra.mxu0 0.0
    %1589 = vmatprep.subr.mxu0 0.0
    %1590 = vmatpush1.xpose.msra.mxu0 0.0
    %1591 = vmatprep.subr.mxu0 0.0
    %1592 = vmatpush1.xpose.msra.mxu0 0.0
    %1593 = vmatprep.subr.mxu0 0.0
    %1594 = vmatpush1.xpose.msra.mxu0 0.0
    %1595 = vmatprep.subr.mxu0 0.0
    %1596 = vmatpush1.xpose.msra.mxu0 0.0
    %1597 = vmatprep.subr.mxu0 0.0
    %1598 = vmatpush1.xpose.msra.mxu0 0.0
    %1599 = vmatprep.subr.mxu0 0.0
    %1600 = vmatpush1.xpose.msra.mxu0 0.0
    %1601 = vmatprep.subr.mxu0 0.0
    %1602 = vmatpush1.xpose.msra.mxu0 0.0
    %1603 = vmatprep.subr.mxu0 0.0
    %1604 = vmatpush1.xpose.msra.mxu0 0.0
    %1605 = vmatprep.subr.mxu0 0.0
    %1606 = vmatpush1.xpose.msra.mxu0 0.0
    %1607 = vmatprep.subr.mxu0 0.0
    %1608 = vmatpush1.xpose.msra.mxu0 0.0
    %1609 = vmatprep.subr.mxu0 0.0
    %1610 = vmatpush1.xpose.msra.mxu0 0.0
    %1611 = vmatprep.subr.mxu0 0.0
    %1612 = vmatpush1.xpose.msra.mxu0 0.0
    %1613 = vmatprep.subr.mxu0 0.0
    %1614 = vmatpush1.xpose.msra.mxu0 0.0
    %1615 = vmatprep.subr.mxu0 0.0
    %1616 = vmatpush1.xpose.msra.mxu0 0.0
    %1617 = vmatprep.subr.mxu0 0.0
    %1618 = vmatpush1.xpose.msra.mxu0 0.0
    %1619 = vmatprep.subr.mxu0 0.0
    %1620 = vmatpush1.xpose.msra.mxu0 0.0
    %1621 = vmatprep.subr.mxu0 0.0
    %1622 = vmatpush1.xpose.msra.mxu0 0.0
    %1623 = vmatprep.subr.mxu0 0.0
    %1624 = vmatpush1.xpose.msra.mxu0 0.0
    %1625 = vmatprep.subr.mxu0 0.0
    %1626 = vmatpush1.xpose.msra.mxu0 0.0
    %1627 = vmatprep.mubr.f32.mxu0 0.0
    %1628 = vmatmul.mubr.f32.gmra.mrb[0].mxu0 %v1559
    %v1629 = vpop.f32.mrb[0].mxu0
    %v1630 = vadd.f32 0.0, %v1629
    %v1631 = vpop.f32.mrb[0].mxu0
    %1632 = vdwg.mxu0
    %1633 = vrot.lane.b32.xlu0 %v200, 112
    %v1634 = vpop.permute.xlu0 %1633
    %v1636 = vsel %vm521, %v1477, 0
    %v1638 = vsel %vm521, %v1634, 0
    %1640 = vmatprep.subr.mxu0 0.0
    %1641 = vmatpush1.xpose.msra.mxu0 %v1638
    %1642 = vmatprep.subr.mxu0 0.0
    %1643 = vmatpush1.xpose.msra.mxu0 0.0
    %1644 = vmatprep.subr.mxu0 0.0
    %1645 = vmatpush1.xpose.msra.mxu0 0.0
    %1646 = vmatprep.subr.mxu0 0.0
    %1647 = vmatpush1.xpose.msra.mxu0 0.0
    %1648 = vmatprep.subr.mxu0 0.0
    %1649 = vmatpush1.xpose.msra.mxu0 0.0
    %1650 = vmatprep.subr.mxu0 0.0
    %1651 = vmatpush1.xpose.msra.mxu0 0.0
    %1652 = vmatprep.subr.mxu0 0.0
    %1653 = vmatpush1.xpose.msra.mxu0 0.0
    %1654 = vmatprep.subr.mxu0 0.0
    %1655 = vmatpush1.xpose.msra.mxu0 0.0
    %1656 = vmatprep.subr.mxu0 0.0
    %1657 = vmatpush1.xpose.msra.mxu0 0.0
    %1658 = vmatprep.subr.mxu0 0.0
    %1659 = vmatpush1.xpose.msra.mxu0 0.0
    %1660 = vmatprep.subr.mxu0 0.0
    %1661 = vmatpush1.xpose.msra.mxu0 0.0
    %1662 = vmatprep.subr.mxu0 0.0
    %1663 = vmatpush1.xpose.msra.mxu0 0.0
    %1664 = vmatprep.subr.mxu0 0.0
    %1665 = vmatpush1.xpose.msra.mxu0 0.0
    %1666 = vmatprep.subr.mxu0 0.0
    %1667 = vmatpush1.xpose.msra.mxu0 0.0
    %1668 = vmatprep.subr.mxu0 0.0
    %1669 = vmatpush1.xpose.msra.mxu0 0.0
    %1670 = vmatprep.subr.mxu0 0.0
    %1671 = vmatpush1.xpose.msra.mxu0 0.0
    %1672 = vmatprep.subr.mxu0 0.0
    %1673 = vmatpush1.xpose.msra.mxu0 0.0
    %1674 = vmatprep.subr.mxu0 0.0
    %1675 = vmatpush1.xpose.msra.mxu0 0.0
    %1676 = vmatprep.subr.mxu0 0.0
    %1677 = vmatpush1.xpose.msra.mxu0 0.0
    %1678 = vmatprep.subr.mxu0 0.0
    %1679 = vmatpush1.xpose.msra.mxu0 0.0
    %1680 = vmatprep.subr.mxu0 0.0
    %1681 = vmatpush1.xpose.msra.mxu0 0.0
    %1682 = vmatprep.subr.mxu0 0.0
    %1683 = vmatpush1.xpose.msra.mxu0 0.0
    %1684 = vmatprep.subr.mxu0 0.0
    %1685 = vmatpush1.xpose.msra.mxu0 0.0
    %1686 = vmatprep.subr.mxu0 0.0
    %1687 = vmatpush1.xpose.msra.mxu0 0.0
    %1688 = vmatprep.subr.mxu0 0.0
    %1689 = vmatpush1.xpose.msra.mxu0 0.0
    %1690 = vmatprep.subr.mxu0 0.0
    %1691 = vmatpush1.xpose.msra.mxu0 0.0
    %1692 = vmatprep.subr.mxu0 0.0
    %1693 = vmatpush1.xpose.msra.mxu0 0.0
    %1694 = vmatprep.subr.mxu0 0.0
    %1695 = vmatpush1.xpose.msra.mxu0 0.0
    %1696 = vmatprep.subr.mxu0 0.0
    %1697 = vmatpush1.xpose.msra.mxu0 0.0
    %1698 = vmatprep.subr.mxu0 0.0
    %1699 = vmatpush1.xpose.msra.mxu0 0.0
    %1700 = vmatprep.subr.mxu0 0.0
    %1701 = vmatpush1.xpose.msra.mxu0 0.0
    %1702 = vmatprep.subr.mxu0 0.0
    %1703 = vmatpush1.xpose.msra.mxu0 0.0
    %1704 = vmatprep.mubr.f32.mxu0 0.0
    %1705 = vmatmul.mubr.f32.gmra.mrb[0].mxu0 %v1636
    %v1706 = vpop.f32.mrb[0].mxu0
    %v1707 = vadd.f32 0.0, %v1706
    %v1708 = vpop.f32.mrb[0].mxu0
    %1709 = vdwg.mxu0
    %1710 = vrot.lane.b32.xlu0 %v203, 112
    %v1711 = vpop.permute.xlu0 %1710
    %v1713 = vsel %vm521, %v1478, 0
    %v1715 = vsel %vm521, %v1711, 0
    %1717 = vmatprep.subr.mxu0 0.0
    %1718 = vmatpush1.xpose.msra.mxu0 %v1715
    %1719 = vmatprep.subr.mxu0 0.0
    %1720 = vmatpush1.xpose.msra.mxu0 0.0
    %1721 = vmatprep.subr.mxu0 0.0
    %1722 = vmatpush1.xpose.msra.mxu0 0.0
    %1723 = vmatprep.subr.mxu0 0.0
    %1724 = vmatpush1.xpose.msra.mxu0 0.0
    %1725 = vmatprep.subr.mxu0 0.0
    %1726 = vmatpush1.xpose.msra.mxu0 0.0
    %1727 = vmatprep.subr.mxu0 0.0
    %1728 = vmatpush1.xpose.msra.mxu0 0.0
    %1729 = vmatprep.subr.mxu0 0.0
    %1730 = vmatpush1.xpose.msra.mxu0 0.0
    %1731 = vmatprep.subr.mxu0 0.0
    %1732 = vmatpush1.xpose.msra.mxu0 0.0
    %1733 = vmatprep.subr.mxu0 0.0
    %1734 = vmatpush1.xpose.msra.mxu0 0.0
    %1735 = vmatprep.subr.mxu0 0.0
    %1736 = vmatpush1.xpose.msra.mxu0 0.0
    %1737 = vmatprep.subr.mxu0 0.0
    %1738 = vmatpush1.xpose.msra.mxu0 0.0
    %1739 = vmatprep.subr.mxu0 0.0
    %1740 = vmatpush1.xpose.msra.mxu0 0.0
    %1741 = vmatprep.subr.mxu0 0.0
    %1742 = vmatpush1.xpose.msra.mxu0 0.0
    %1743 = vmatprep.subr.mxu0 0.0
    %1744 = vmatpush1.xpose.msra.mxu0 0.0
    %1745 = vmatprep.subr.mxu0 0.0
    %1746 = vmatpush1.xpose.msra.mxu0 0.0
    %1747 = vmatprep.subr.mxu0 0.0
    %1748 = vmatpush1.xpose.msra.mxu0 0.0
    %1749 = vmatprep.subr.mxu0 0.0
    %1750 = vmatpush1.xpose.msra.mxu0 0.0
    %1751 = vmatprep.subr.mxu0 0.0
    %1752 = vmatpush1.xpose.msra.mxu0 0.0
    %1753 = vmatprep.subr.mxu0 0.0
    %1754 = vmatpush1.xpose.msra.mxu0 0.0
    %1755 = vmatprep.subr.mxu0 0.0
    %1756 = vmatpush1.xpose.msra.mxu0 0.0
    %1757 = vmatprep.subr.mxu0 0.0
    %1758 = vmatpush1.xpose.msra.mxu0 0.0
    %1759 = vmatprep.subr.mxu0 0.0
    %1760 = vmatpush1.xpose.msra.mxu0 0.0
    %1761 = vmatprep.subr.mxu0 0.0
    %1762 = vmatpush1.xpose.msra.mxu0 0.0
    %1763 = vmatprep.subr.mxu0 0.0
    %1764 = vmatpush1.xpose.msra.mxu0 0.0
    %1765 = vmatprep.subr.mxu0 0.0
    %1766 = vmatpush1.xpose.msra.mxu0 0.0
    %1767 = vmatprep.subr.mxu0 0.0
    %1768 = vmatpush1.xpose.msra.mxu0 0.0
    %1769 = vmatprep.subr.mxu0 0.0
    %1770 = vmatpush1.xpose.msra.mxu0 0.0
    %1771 = vmatprep.subr.mxu0 0.0
    %1772 = vmatpush1.xpose.msra.mxu0 0.0
    %1773 = vmatprep.subr.mxu0 0.0
    %1774 = vmatpush1.xpose.msra.mxu0 0.0
    %1775 = vmatprep.subr.mxu0 0.0
    %1776 = vmatpush1.xpose.msra.mxu0 0.0
    %1777 = vmatprep.subr.mxu0 0.0
    %1778 = vmatpush1.xpose.msra.mxu0 0.0
    %1779 = vmatprep.subr.mxu0 0.0
    %1780 = vmatpush1.xpose.msra.mxu0 0.0
    %1781 = vmatprep.mubr.f32.mxu0 0.0
    %1782 = vmatmul.mubr.f32.gmra.mrb[0].mxu0 %v1713
    %v1783 = vpop.f32.mrb[0].mxu0
    %v1784 = vadd.f32 0.0, %v1783
    %v1785 = vpop.f32.mrb[0].mxu0
    %1786 = vdwg.mxu0
    %v1787 = vpack.c.bf16 %v1553, %v1553
    %v1788 = vpack.c.bf16 %v1630, %v1630
    %v1789 = vpack.c.bf16 %v1707, %v1707
    %v1790 = vpack.c.bf16 %v1784, %v1784
    %v1792 = vsel %vm228, %v1787, 0
    %1794 = vmatprep.subr.bf16.mxu0 0
    %1795 = vmatpush1.bf16.msra.mxu0 %v879
    %1796 = vmatprep.subr.bf16.mxu0 0
    %1797 = vmatpush1.bf16.msra.mxu0 0
    %1798 = vmatprep.subr.bf16.mxu0 0
    %1799 = vmatpush1.bf16.msra.mxu0 0
    %1800 = vmatprep.subr.bf16.mxu0 0
    %1801 = vmatpush1.bf16.msra.mxu0 0
    %1802 = vmatprep.subr.bf16.mxu0 0
    %1803 = vmatpush1.bf16.msra.mxu0 0
    %1804 = vmatprep.subr.bf16.mxu0 0
    %1805 = vmatpush1.bf16.msra.mxu0 0
    %1806 = vmatprep.subr.bf16.mxu0 0
    %1807 = vmatpush1.bf16.msra.mxu0 0
    %1808 = vmatprep.subr.bf16.mxu0 0
    %1809 = vmatpush1.bf16.msra.mxu0 0
    %1810 = vmatprep.subr.bf16.mxu0 0
    %1811 = vmatpush1.bf16.msra.mxu0 0
    %1812 = vmatprep.subr.bf16.mxu0 0
    %1813 = vmatpush1.bf16.msra.mxu0 0
    %1814 = vmatprep.subr.bf16.mxu0 0
    %1815 = vmatpush1.bf16.msra.mxu0 0
    %1816 = vmatprep.subr.bf16.mxu0 0
    %1817 = vmatpush1.bf16.msra.mxu0 0
    %1818 = vmatprep.subr.bf16.mxu0 0
    %1819 = vmatpush1.bf16.msra.mxu0 0
    %1820 = vmatprep.subr.bf16.mxu0 0
    %1821 = vmatpush1.bf16.msra.mxu0 0
    %1822 = vmatprep.subr.bf16.mxu0 0
    %1823 = vmatpush1.bf16.msra.mxu0 0
    %1824 = vmatprep.subr.bf16.mxu0 0
    %1825 = vmatpush1.bf16.msra.mxu0 0
    %1826 = vmatprep.mubr.bf16.mxu0 0
    %1827 = vmatmul.mubr.bf16.gmra.mrb[0].mxu0 %v1792
    %v1828 = vpop.f32.mrb[0].mxu0
    %v1829 = vadd.f32 0.0, %v1828
    %v1830 = vpop.f32.mrb[0].mxu0
    %v1831 = vpop.f32.mrb[0].mxu0
    %v1832 = vpop.f32.mrb[0].mxu0
    %1833 = vdwg.mxu0
    %v1835 = vsel %vm228, %v1788, 0
    %1837 = vmatprep.subr.bf16.mxu0 0
    %1838 = vmatpush1.bf16.msra.mxu0 %v925
    %1839 = vmatprep.subr.bf16.mxu0 0
    %1840 = vmatpush1.bf16.msra.mxu0 0
    %1841 = vmatprep.subr.bf16.mxu0 0
    %1842 = vmatpush1.bf16.msra.mxu0 0
    %1843 = vmatprep.subr.bf16.mxu0 0
    %1844 = vmatpush1.bf16.msra.mxu0 0
    %1845 = vmatprep.subr.bf16.mxu0 0
    %1846 = vmatpush1.bf16.msra.mxu0 0
    %1847 = vmatprep.subr.bf16.mxu0 0
    %1848 = vmatpush1.bf16.msra.mxu0 0
    %1849 = vmatprep.subr.bf16.mxu0 0
    %1850 = vmatpush1.bf16.msra.mxu0 0
    %1851 = vmatprep.subr.bf16.mxu0 0
    %1852 = vmatpush1.bf16.msra.mxu0 0
    %1853 = vmatprep.subr.bf16.mxu0 0
    %1854 = vmatpush1.bf16.msra.mxu0 0
    %1855 = vmatprep.subr.bf16.mxu0 0
    %1856 = vmatpush1.bf16.msra.mxu0 0
    %1857 = vmatprep.subr.bf16.mxu0 0
    %1858 = vmatpush1.bf16.msra.mxu0 0
    %1859 = vmatprep.subr.bf16.mxu0 0
    %1860 = vmatpush1.bf16.msra.mxu0 0
    %1861 = vmatprep.subr.bf16.mxu0 0
    %1862 = vmatpush1.bf16.msra.mxu0 0
    %1863 = vmatprep.subr.bf16.mxu0 0
    %1864 = vmatpush1.bf16.msra.mxu0 0
    %1865 = vmatprep.subr.bf16.mxu0 0
    %1866 = vmatpush1.bf16.msra.mxu0 0
    %1867 = vmatprep.subr.bf16.mxu0 0
    %1868 = vmatpush1.bf16.msra.mxu0 0
    %1869 = vmatprep.mubr.bf16.mxu0 0
    %1870 = vmatmul.mubr.bf16.gmra.mrb[0].mxu0 %v1835
    %v1871 = vpop.f32.mrb[0].mxu0
    %v1872 = vadd.f32 0.0, %v1871
    %v1873 = vpop.f32.mrb[0].mxu0
    %v1874 = vpop.f32.mrb[0].mxu0
    %v1875 = vpop.f32.mrb[0].mxu0
    %1876 = vdwg.mxu0
    %v1878 = vsel %vm228, %v1789, 0
    %1880 = vmatprep.subr.bf16.mxu0 0
    %1881 = vmatpush1.bf16.msra.mxu0 %v971
    %1882 = vmatprep.subr.bf16.mxu0 0
    %1883 = vmatpush1.bf16.msra.mxu0 0
    %1884 = vmatprep.subr.bf16.mxu0 0
    %1885 = vmatpush1.bf16.msra.mxu0 0
    %1886 = vmatprep.subr.bf16.mxu0 0
    %1887 = vmatpush1.bf16.msra.mxu0 0
    %1888 = vmatprep.subr.bf16.mxu0 0
    %1889 = vmatpush1.bf16.msra.mxu0 0
    %1890 = vmatprep.subr.bf16.mxu0 0
    %1891 = vmatpush1.bf16.msra.mxu0 0
    %1892 = vmatprep.subr.bf16.mxu0 0
    %1893 = vmatpush1.bf16.msra.mxu0 0
    %1894 = vmatprep.subr.bf16.mxu0 0
    %1895 = vmatpush1.bf16.msra.mxu0 0
    %1896 = vmatprep.subr.bf16.mxu0 0
    %1897 = vmatpush1.bf16.msra.mxu0 0
    %1898 = vmatprep.subr.bf16.mxu0 0
    %1899 = vmatpush1.bf16.msra.mxu0 0
    %1900 = vmatprep.subr.bf16.mxu0 0
    %1901 = vmatpush1.bf16.msra.mxu0 0
    %1902 = vmatprep.subr.bf16.mxu0 0
    %1903 = vmatpush1.bf16.msra.mxu0 0
    %1904 = vmatprep.subr.bf16.mxu0 0
    %1905 = vmatpush1.bf16.msra.mxu0 0
    %1906 = vmatprep.subr.bf16.mxu0 0
    %1907 = vmatpush1.bf16.msra.mxu0 0
    %1908 = vmatprep.subr.bf16.mxu0 0
    %1909 = vmatpush1.bf16.msra.mxu0 0
    %1910 = vmatprep.subr.bf16.mxu0 0
    %1911 = vmatpush1.bf16.msra.mxu0 0
    %1912 = vmatprep.mubr.bf16.mxu0 0
    %1913 = vmatmul.mubr.bf16.gmra.mrb[0].mxu0 %v1878
    %v1914 = vpop.f32.mrb[0].mxu0
    %v1915 = vadd.f32 0.0, %v1914
    %v1916 = vpop.f32.mrb[0].mxu0
    %v1917 = vpop.f32.mrb[0].mxu0
    %v1918 = vpop.f32.mrb[0].mxu0
    %1919 = vdwg.mxu0
    %v1921 = vsel %vm228, %v1790, 0
    %1923 = vmatprep.subr.bf16.mxu0 0
    %1924 = vmatpush1.bf16.msra.mxu0 %v1017
    %1925 = vmatprep.subr.bf16.mxu0 0
    %1926 = vmatpush1.bf16.msra.mxu0 0
    %1927 = vmatprep.subr.bf16.mxu0 0
    %1928 = vmatpush1.bf16.msra.mxu0 0
    %1929 = vmatprep.subr.bf16.mxu0 0
    %1930 = vmatpush1.bf16.msra.mxu0 0
    %1931 = vmatprep.subr.bf16.mxu0 0
    %1932 = vmatpush1.bf16.msra.mxu0 0
    %1933 = vmatprep.subr.bf16.mxu0 0
    %1934 = vmatpush1.bf16.msra.mxu0 0
    %1935 = vmatprep.subr.bf16.mxu0 0
    %1936 = vmatpush1.bf16.msra.mxu0 0
    %1937 = vmatprep.subr.bf16.mxu0 0
    %1938 = vmatpush1.bf16.msra.mxu0 0
    %1939 = vmatprep.subr.bf16.mxu0 0
    %1940 = vmatpush1.bf16.msra.mxu0 0
    %1941 = vmatprep.subr.bf16.mxu0 0
    %1942 = vmatpush1.bf16.msra.mxu0 0
    %1943 = vmatprep.subr.bf16.mxu0 0
    %1944 = vmatpush1.bf16.msra.mxu0 0
    %1945 = vmatprep.subr.bf16.mxu0 0
    %1946 = vmatpush1.bf16.msra.mxu0 0
    %1947 = vmatprep.subr.bf16.mxu0 0
    %1948 = vmatpush1.bf16.msra.mxu0 0
    %1949 = vmatprep.subr.bf16.mxu0 0
    %1950 = vmatpush1.bf16.msra.mxu0 0
    %1951 = vmatprep.subr.bf16.mxu0 0
    %1952 = vmatpush1.bf16.msra.mxu0 0
    %1953 = vmatprep.subr.bf16.mxu0 0
    %1954 = vmatpush1.bf16.msra.mxu0 0
    %1955 = vmatprep.mubr.bf16.mxu0 0
    %1956 = vmatmul.mubr.bf16.gmra.mrb[0].mxu0 %v1921
    %v1957 = vpop.f32.mrb[0].mxu0
    %v1958 = vadd.f32 0.0, %v1957
    %v1959 = vpop.f32.mrb[0].mxu0
    %v1960 = vpop.f32.mrb[0].mxu0
    %v1961 = vpop.f32.mrb[0].mxu0
    %1962 = vdwg.mxu0
    %v1963 = vsel %vm1059, %v1829, 0.0
    %v1964 = vsel %vm1059, %v1872, 0.0
    %v1965 = vadd.f32 %v1963, %v1964
    %v1966 = vsel %vm1059, %v1915, 0.0
    %v1967 = vadd.f32 %v1965, %v1966
    %v1968 = vsel %vm1059, %v1958, 0.0
    %v1969 = vadd.f32 %v1967, %v1968
    %v1970 = vadd.f32 %v1969, %v1070
    %v1971 = vsel %vm1059, %v1970, 0.0
    %1972 = vadd.xlane.f32.xlu0 %v1971
    %v1973 = vpop.xlane.xlu0 %1972
    %v1974 = vmul.f32 %v1973, %v1075
    %v1975 = vsub.f32 %v1970, %v1974
    %v1976 = vmul.f32 %v1975, %v1975
    %v1977 = vsel %vm1059, %v1976, 0.0
    %1978 = vadd.xlane.f32.xlu0 %v1977
    %v1979 = vpop.xlane.xlu0 %1978
    %v1980 = vmul.f32 %v1979, %v1075
    %v1981 = vadd.f32 %v1980, 1e-05
    %v1982 = vrsqrt.pop %v1981
    %v1983 = vmul.f32 %v1975, %v1982
    %v1984 = vmul.f32 %v1983, %v1089
    %v1985 = vadd.f32 %v1984, %v1094
    %v1987 = vrot.slane %v1985, 1
    %1988 = vrot.lane.b32.xlu0 %v1987, 32
    %v1989 = vpop.permute.xlu0 %1988
    %v1991 = vrot.slane %v1985, 2
    %1992 = vrot.lane.b32.xlu0 %v1991, 64
    %v1993 = vpop.permute.xlu0 %1992
    %v1995 = vrot.slane %v1985, 3
    %1996 = vrot.lane.b32.xlu0 %v1995, 96
    %v1997 = vpop.permute.xlu0 %1996
    %v1999 = vrot.slane %v1985, 4
    %v2001 = vrot.slane %v1985, 5
    %2002 = vrot.lane.b32.xlu0 %v2001, 32
    %v2003 = vpop.permute.xlu0 %2002
    %v2005 = vrot.slane %v1985, 6
    %2006 = vrot.lane.b32.xlu0 %v2005, 64
    %v2007 = vpop.permute.xlu0 %2006
    %v2009 = vrot.slane %v1985, 7
    %2010 = vrot.lane.b32.xlu0 %v2009, 96
    %v2011 = vpop.permute.xlu0 %2010
    %v2013 = vsel %vm1059, %v1985, %v1989
    %v2014 = vsel %vm1124, %v2013, %v1993
    %v2015 = vsel %vm1126, %v2014, %v1997
    %v2016 = vsel %vm1059, %v1999, %v2003
    %v2017 = vsel %vm1124, %v2016, %v2007
    %v2018 = vsel %vm1126, %v2017, %v2011
    %v2021 = vrot.slane %v2015, 7
    %v2022 = vrot.slane %v2018, 7
    %vm2025 = vcmask 1040384
    %v2026 = vsel %vm2025, %v1127, %v2021
    %v2027 = vsel %vm2025, %v1130, %v2022
    %v2030 = vcombine.low %v2026, %v2027
    %v2032 = vunpack.c.l.s4 1983009808
    %v2033 = vunpack.c.0.s8 %v2032
    %v2034 = vlaneseq
    %v2035 = vshrl.u32 %v2034, 7
    %v2036 = vsub.s32 %v2033, %v2035
    %v2037 = vrot.slane %v2030, %v2036
    %2039 = vst [vmem:[#allocation2] sm:$0xf] %v2037
    // Predicated region
    $region30: #{tpu_custom_call.1} parent=1 // pred_check
      _
    $region31: #{tpu_custom_call.1} parent=1 // pred_check_branch
      %2041 = sbr.rel (0) target = $region33
    $region32: #{tpu_custom_call.1} parent=1 // pred_region
      %s2043 = ssub.s32 64, 64
      %2044 = vsyncadd [#allocation3], %s2043
      %s2046 = sshll.u32 [#allocation2], 4
      %s2047 = int_to_ptr.vmem [resolvable:$true] %s2046
      %2049 = dma.vmem_to_hbm [thread:$0]  %s2047, 64, %s7, [#allocation3]
    $region33: #{tpu_custom_call.1} parent=1 // pred_fallthru
      _
    // Predicated region
    $region34: #{tpu_custom_call.1} parent=1 // pred_check
      _
    $region35: #{tpu_custom_call.1} parent=1 // pred_check_branch
      %2051 = sbr.rel (0) target = $region37
    $region36: #{tpu_custom_call.1} parent=1 // pred_region
      %2052 = dma.done [#allocation3], 64
    $region37: #{tpu_custom_call.1} parent=1 // pred_fallthru
      _
    %2053 = vsyncpa [#allocation3], 1

</llo_original>
